<compile_context>
chip_gen: v5e
topology: v5e:2x2
jax: 0.10.0
libtpu: 0.0.40
codegen_flags: <defaults>
</compile_context>

<pallas_src>
import functools
from typing import NamedTuple

import jax
import jax.numpy as jnp
from jax.experimental import pallas as pl
from jax.experimental.pallas import tpu as pltpu

_NEG_BIG = -1e30     # bias for padded vocab columns (exp -> 0 in the LSE)
_NUM_CORES = 2       # vocab tiles split over 2 TCs on v7x; sequential elsewhere


def _round_up(x, m):
    return (x + m - 1) // m * m


class Dims(NamedTuple):
    H: int
    E: int
    D: int
    Hp: int
    Ep: int
    Dp: int
    TD: int


# ----------------------------------------------------------------------------
# One-off weight preparation (hoisted out of the per-token step).
# ----------------------------------------------------------------------------
def prepare_params(params, *, tile_d_max=2048):
    H = params["w_hh"].shape[1]
    E = params["emb"].shape[1]
    D = params["w_out"].shape[0]

    Hp = _round_up(H, 128)
    Ep = _round_up(E, 128)
    TD = min(tile_d_max, _round_up(D, 128))          # lane-dense vocab tile
    nd = (_round_up(D, 128) + TD - 1) // TD
    nd_per_core = (nd + _NUM_CORES - 1) // _NUM_CORES
    Dp = _NUM_CORES * nd_per_core * TD

    def gru_w(w, in_dim, in_pad):   # (3H, in) -> (in_pad, 3*Hp), gate-block padded
        w3 = jnp.pad(w.reshape(3, H, in_dim),
                     ((0, 0), (0, Hp - H), (0, in_pad - in_dim)))
        return jnp.transpose(w3, (2, 0, 1)).reshape(in_pad, 3 * Hp)

    def gru_b(b):
        return jnp.pad(b.reshape(3, H), ((0, 0), (0, Hp - H))).reshape(1, 3 * Hp)

    weights = {
        "emb": params["emb"],
        "wih_t": gru_w(params["w_ih"], E, Ep),
        "whh_t": gru_w(params["w_hh"], H, Hp),
        "bih": gru_b(params["b_ih"]),
        "bhh": gru_b(params["b_hh"]),
        # b_align only shifts scores by a per-row constant along the softmax
        # axis, so it is dropped (mathematically exact).
        "walign": jnp.pad(params["w_align"], ((0, Hp - H), (0, Hp - H))),
        "wattn_ctx": jnp.pad(params["w_attn"][:, :H].T, ((0, Hp - H), (0, Hp - H))),
        "wattn_h": jnp.pad(params["w_attn"][:, H:].T, ((0, Hp - H), (0, Hp - H))),
        "battn": jnp.pad(params["b_attn"], (0, Hp - H)).reshape(1, Hp),
        # Vocab projection weight streamed in bf16 (HBM-bound phase);
        # accumulation stays f32 in the kernel.
        "wout_t": jnp.pad(params["w_out"].T,
                          ((0, Hp - H), (0, Dp - D))).astype(jnp.bfloat16),
        "bout": jnp.pad(params["b_out"], (0, Dp - D),
                        constant_values=_NEG_BIG).reshape(1, Dp),
    }
    return weights, Dims(H=H, E=E, D=D, Hp=Hp, Ep=Ep, Dp=Dp, TD=TD)


# ----------------------------------------------------------------------------
# Kernel 1: GRU cell + attention. Runs once per step; outputs h_new + attnal.
# ----------------------------------------------------------------------------
def gru_attn_kernel(x_ref, h0_ref, enc_ref, wih_ref, whh_ref, bih_ref, bhh_ref,
                    walign_ref, wattn_ctx_ref, wattn_h_ref, battn_ref,
                    hnew_ref, attnal_ref, *, hidden_pad):
    Hp = hidden_pad
    x = x_ref[...]                                          # (Bp, Ep)
    h = h0_ref[...]                                         # (Bp, Hp)

    # GRU cell, PyTorch gate ordering (r, z, n); slices stay 128-aligned.
    gi = jnp.dot(x, wih_ref[...], preferred_element_type=jnp.float32) + bih_ref[...]
    gh = jnp.dot(h, whh_ref[...], preferred_element_type=jnp.float32) + bhh_ref[...]
    r = jax.nn.sigmoid(gi[:, :Hp] + gh[:, :Hp])
    z = jax.nn.sigmoid(gi[:, Hp:2 * Hp] + gh[:, Hp:2 * Hp])
    n = jnp.tanh(gi[:, 2 * Hp:] + r * gh[:, 2 * Hp:])
    h_new = (1.0 - z) * n + z * h                           # (Bp, Hp)
    hnew_ref[...] = h_new

    # Luong attention with query-side align projection:
    #   scores[b,s] = <enc[b,s,:], h_new[b,:] @ W_align>
    enc = enc_ref[...]                                      # (Bp, S, Hp)
    q = jnp.dot(h_new, walign_ref[...], preferred_element_type=jnp.float32)
    s = jnp.einsum("bqh,bsh->bqs", q[:, None, :], enc,
                   preferred_element_type=jnp.float32)      # (Bp, 1, S)
    smax = jnp.max(s, axis=-1, keepdims=True)
    e = jnp.exp(s - smax)
    p = e / jnp.sum(e, axis=-1, keepdims=True)              # exact; runs once
    ctx = jnp.einsum("bqs,bsh->bqh", p, enc,
                     preferred_element_type=jnp.float32)[:, 0, :]

    # attnal = tanh([ctx, h_new] @ W_attn^T + b) without the lane concat.
    attnal = jnp.tanh(
        jnp.dot(ctx, wattn_ctx_ref[...], preferred_element_type=jnp.float32)
        + jnp.dot(h_new, wattn_h_ref[...], preferred_element_type=jnp.float32)
        + battn_ref[...])
    attnal_ref[...] = attnal.astype(attnal_ref.dtype)       # bf16 round trip


# ----------------------------------------------------------------------------
# Kernel 2: vocab-tiled output projection + online logsumexp.
# Grid: (cores, vocab_tiles_per_core); leading axis is "parallel" (v7x 2 TCs).
# ----------------------------------------------------------------------------
def vocab_proj_kernel(attnal_ref, wout_ref, bout_ref, logits_ref, lse_ref,
                      m_sc, l_sc):
    d = pl.program_id(1)

    @pl.when(d == 0)
    def _():
        m_sc[...] = jnp.full(m_sc.shape, -jnp.inf, jnp.float32)
        l_sc[...] = jnp.zeros(l_sc.shape, jnp.float32)

    logits = (jnp.dot(attnal_ref[...], wout_ref[...],
                      preferred_element_type=jnp.float32) + bout_ref[...])
    logits_ref[...] = logits                                # (Bp, TD) f32

    m_prev = m_sc[...]
    m_new = jnp.maximum(m_prev, jnp.max(logits, axis=-1, keepdims=True))
    l_sc[...] = (l_sc[...] * jnp.exp(m_prev - m_new)
                 + jnp.sum(jnp.exp(logits - m_new), axis=-1, keepdims=True))
    m_sc[...] = m_new

    @pl.when(d == pl.num_programs(1) - 1)
    def _():
        lse_ref[...] = (m_sc[...] + jnp.log(l_sc[...]))[None]   # (1, Bp, 1)


# ----------------------------------------------------------------------------
# Per-token step: embedding gather + padding glue + the two pallas_calls.
# ----------------------------------------------------------------------------
def decoder_gru_attn_step(input_ids, prev_hidden, encoder_output, weights, dims):
    """
    input_ids:      (1, B) int32
    prev_hidden:    (1, B, H) float32
    encoder_output: (S, B, H) float32
    returns: (log_probs (1, B, D), hidden (1, B, H))
    """
    S, B, H = encoder_output.shape
    Hp, Ep, Dp, TD, D = dims.Hp, dims.Ep, dims.Dp, dims.TD, dims.D
    # The weight stream cost is independent of B: real batch/beam rows up to
    # ~128 are essentially free -- batch the decode loop into this call if the
    # serving loop allows it, instead of padding B=2 -> 8.
    Bp = _round_up(B, 8)

    # Per-step glue: embedding gather (jnp.take) + lane/sublane-dense padding.
    # The (S,B,H)->(B,S,H) transpose fuses with the mandatory padding copy.
    x = weights["emb"][input_ids[0]]                             # (B, E)
    x = jnp.pad(x, ((0, Bp - B), (0, Ep - dims.E)))
    h0 = jnp.pad(prev_hidden[0], ((0, Bp - B), (0, Hp - H)))
    enc = jnp.pad(jnp.transpose(encoder_output, (1, 0, 2)),
                  ((0, Bp - B), (0, 0), (0, Hp - H)))

    def fixed1(shape):
        return pl.BlockSpec(shape, lambda i: (0,) * len(shape))

    # ---- pallas_call #1: GRU + attention (single grid step, small) ----------
    h_new, attnal = pl.pallas_call(
        functools.partial(gru_attn_kernel, hidden_pad=Hp),
        grid=(1,),
        in_specs=[
            fixed1((Bp, Ep)),            # x
            fixed1((Bp, Hp)),            # h0
            fixed1((Bp, S, Hp)),         # enc
            fixed1((Ep, 3 * Hp)),        # w_ih
            fixed1((Hp, 3 * Hp)),        # w_hh
            fixed1((1, 3 * Hp)),         # b_ih
            fixed1((1, 3 * Hp)),         # b_hh
            fixed1((Hp, Hp)),            # w_align
            fixed1((Hp, Hp)),            # w_attn (context half)
            fixed1((Hp, Hp)),            # w_attn (hidden half)
            fixed1((1, Hp)),             # b_attn
        ],
        out_specs=(fixed1((Bp, Hp)), fixed1((Bp, Hp))),
        out_shape=(jax.ShapeDtypeStruct((Bp, Hp), jnp.float32),
                   jax.ShapeDtypeStruct((Bp, Hp), jnp.bfloat16)),
    )(x, h0, enc, weights["wih_t"], weights["whh_t"], weights["bih"],
      weights["bhh"], weights["walign"], weights["wattn_ctx"],
      weights["wattn_h"], weights["battn"])

    # ---- pallas_call #2: vocab projection, tiled + split over cores ---------
    nd = Dp // TD
    nd_per_core = nd // _NUM_CORES

    # Generation-aware VMEM budget (v7x: 64 MiB/TC; v5e/v6e: 128 MiB).
    try:
        vmem_cap = int(pltpu.get_tpu_info().vmem_capacity_bytes)
    except Exception:  # pragma: no cover - conservative fallback
        vmem_cap = 64 * 2 ** 20
    streamed = 2 * (Hp * TD * 2 + TD * 4 + Bp * TD * 4)      # double-buffered
    resident = 2 * Bp * Hp * 2 + 2 * _NUM_CORES * Bp * 4 + 2 * Bp * 4
    vmem_limit = int(min(0.9 * vmem_cap,
                         max(32 * 2 ** 20, 4 * (streamed + resident))))

    logits, lse_partial = pl.pallas_call(
        vocab_proj_kernel,
        grid=(_NUM_CORES, nd_per_core),
        in_specs=[
            pl.BlockSpec((Bp, Hp), lambda c, d: (0, 0)),                   # attnal
            pl.BlockSpec((Hp, TD), lambda c, d: (0, c * nd_per_core + d)), # w_out
            pl.BlockSpec((1, TD), lambda c, d: (0, c * nd_per_core + d)),  # b_out
        ],
        out_specs=(
            pl.BlockSpec((Bp, TD), lambda c, d: (0, c * nd_per_core + d)), # logits
            pl.BlockSpec((1, Bp, 1), lambda c, d: (c, 0, 0)),              # lse
        ),
        out_shape=(
            jax.ShapeDtypeStruct((Bp, Dp), jnp.float32),
            jax.ShapeDtypeStruct((_NUM_CORES, Bp, 1), jnp.float32),
        ),
        scratch_shapes=[pltpu.VMEM((Bp, 1), jnp.float32),    # running max
                        pltpu.VMEM((Bp, 1), jnp.float32)],   # running sum(exp)
        compiler_params=pltpu.CompilerParams(
            dimension_semantics=("parallel", "arbitrary"),
            vmem_limit_bytes=vmem_limit),
    )(attnal, weights["wout_t"], weights["bout"])

    # Combine the per-core partial LSEs (padded vocab columns carry -1e30 bias
    # and vanish here).  TODO(synk): fuse the final (logits - lse) / top-k into
    # the consumer (or emit bf16 logits) if the batch/beam dimension grows.
    m = jnp.max(lse_partial, axis=0)                               # (Bp, 1)
    lse = m + jnp.log(jnp.sum(jnp.exp(lse_partial - m), axis=0))   # (Bp, 1)
    log_probs = (logits - lse)[:B, :D]
    return log_probs[None], h_new[:B, :H][None]      # (1,B,D), (1,B,H)


# ----------------------------------------------------------------------------
# Pure-JAX reference mirroring the PyTorch forward exactly (for validation)
# ----------------------------------------------------------------------------
def reference(input_ids, prev_hidden, encoder_output, p):
    H = p["w_hh"].shape[1]
    x = p["emb"][input_ids[0]]                 # (B, E)
    h = prev_hidden[0]                         # (B, H)
    gi = x @ p["w_ih"].T + p["b_ih"]
    gh = h @ p["w_hh"].T + p["b_hh"]
    r = jax.nn.sigmoid(gi[:, :H] + gh[:, :H])
    z = jax.nn.sigmoid(gi[:, H:2 * H] + gh[:, H:2 * H])
    n = jnp.tanh(gi[:, 2 * H:] + r * gh[:, 2 * H:])
    h_new = (1.0 - z) * n + z * h
    hidden = h_new[None]                       # (1, B, H)

    aligned = encoder_output @ p["w_align"].T + p["b_align"]        # (S, B, H)
    scores = jnp.einsum("bh,sbh->bs", h_new, aligned)[:, None, :]   # (B, 1, S)
    w = jax.nn.softmax(scores, axis=2)
    context = jnp.einsum("bos,sbh->boh", w, encoder_output)         # (B, 1, H)
    context = jnp.transpose(context, (1, 0, 2))                     # (1, B, H)
    cat = jnp.concatenate([context, hidden], axis=2)                # (1, B, 2H)
    attnal = jnp.tanh(cat @ p["w_attn"].T + p["b_attn"])
    logits = attnal @ p["w_out"].T + p["b_out"]
    return jax.nn.log_softmax(logits, axis=2), hidden


# ----------------------------------------------------------------------------
# Deterministic parameter init (shapes follow nn.Module __init__)
# ----------------------------------------------------------------------------
def init_params(key, dict_size, embedding_size, hidden_size):
    ks = jax.random.split(key, 11)
    H, E, D = hidden_size, embedding_size, dict_size
    u = lambda k, shape, bound: jax.random.uniform(
        k, shape, jnp.float32, -bound, bound)
    sh = 1.0 / jnp.sqrt(H)
    s2h = 1.0 / jnp.sqrt(2 * H)
    return {
        "emb": jax.random.normal(ks[0], (D, E), jnp.float32),
        "w_ih": u(ks[1], (3 * H, E), sh),
        "w_hh": u(ks[2], (3 * H, H), sh),
        "b_ih": u(ks[3], (3 * H,), sh),
        "b_hh": u(ks[4], (3 * H,), sh),
        "w_align": u(ks[5], (H, H), sh),
        "b_align": u(ks[6], (H,), sh),
        "w_attn": u(ks[7], (H, 2 * H), s2h),
        "b_attn": u(ks[8], (H,), s2h),
        "w_out": u(ks[9], (D, H), sh),
        "b_out": u(ks[10], (D,), sh),
    }


if __name__ == "__main__":
    dict_size, embedding_size, hidden_size = 50, 32, 32
    seq_len, batch = 8, 2

    key = jax.random.PRNGKey(0)
    kp, k1, k2, k3 = jax.random.split(key, 4)
    params = init_params(kp, dict_size, embedding_size, hidden_size)

    input_ids = jax.random.randint(k1, (1, batch), 0, dict_size, jnp.int32)
    prev_hidden = jax.random.normal(k2, (1, batch, hidden_size), jnp.float32)
    encoder_output = jax.random.normal(
        k3, (seq_len, batch, hidden_size), jnp.float32)

    # One-off weight re-layout, hoisted out of the decode step.
    weights, dims = prepare_params(params)
    step_fn = jax.jit(decoder_gru_attn_step, static_argnames=("dims",))

    out, hid = step_fn(input_ids, prev_hidden, encoder_output, weights, dims=dims)
    jax.block_until_ready((out, hid))

    ref_out, ref_hid = reference(input_ids, prev_hidden, encoder_output, params)
    assert out.shape == (1, batch, dict_size)
    assert hid.shape == (1, batch, hidden_size)
    # Hidden path is exact f32 math -> tight check.
    assert jnp.allclose(hid, ref_hid, atol=1e-4, rtol=1e-4)
    # Vocab projection streams bf16 weights with f32 accumulation -> looser.
    assert jnp.allclose(out, ref_out, atol=2e-2, rtol=2e-2)

    print("KERNEL_OK")
</pallas_src>

<mosaic_0001>
module attributes {stable_mosaic.version = 11 : i64} {
  func.func @vocab_proj_kernel(%arg0: i32, %arg1: i32, %arg2: memref<8x128xbf16, #tpu.memory_space<vmem>>, %arg3: memref<128x128xbf16, #tpu.memory_space<vmem>>, %arg4: memref<1x128xf32, #tpu.memory_space<vmem>>, %arg5: memref<8x128xf32, #tpu.memory_space<vmem>>, %arg6: memref<1x8x1xf32, #tpu.memory_space<vmem>>, %arg7: memref<8x1xf32, #tpu.memory_space<vmem>>, %arg8: memref<8x1xf32, #tpu.memory_space<vmem>>) attributes {dimension_semantics = [#tpu.dimension_semantics<parallel>, #tpu.dimension_semantics<arbitrary>], iteration_bounds = array<i64: 2, 1>, scalar_prefetch = 0 : i64, scratch_operands = 2 : i64, tpu.core_type = #tpu.core_type<tc>, window_params = [{pipeline_mode = #tpu.pipeline_mode<synchronous>, transform_indices = @transform_0, window_bounds = array<i64: 8, 128>}, {transform_indices = @transform_1, window_bounds = array<i64: 128, 128>}, {transform_indices = @transform_2, window_bounds = array<i64: 1, 128>}, {transform_indices = @transform_3, window_bounds = array<i64: 8, 128>}, {transform_indices = @transform_4, window_bounds = array<i64: 1, 8, 1>}]} {
    %c0_i32 = arith.constant 0 : i32
    %0 = arith.cmpi eq, %arg1, %c0_i32 : i32
    %1 = arith.extui %0 : i1 to i32
    %c0_i32_0 = arith.constant 0 : i32
    %2 = arith.cmpi ne, %1, %c0_i32_0 : i32
    scf.if %2 {
      %cst_20 = arith.constant 0xFF800000 : f32
      %29 = vector.broadcast %cst_20 : f32 to vector<8x1xf32>
      %c0_21 = arith.constant 0 : index
      %c0_22 = arith.constant 0 : index
      %30 = vector.load %arg7[%c0_21, %c0_22] : memref<8x1xf32, #tpu.memory_space<vmem>>, vector<8x1xf32>
      tpu.vector_store %arg7[%c0_21, %c0_22], %29 {strides = array<i32>} : memref<8x1xf32, #tpu.memory_space<vmem>>, vector<8x1xf32>,
      %cst_23 = arith.constant 0.000000e+00 : f32
      %31 = vector.broadcast %cst_23 : f32 to vector<8x1xf32>
      %c0_24 = arith.constant 0 : index
      %c0_25 = arith.constant 0 : index
      %32 = vector.load %arg8[%c0_24, %c0_25] : memref<8x1xf32, #tpu.memory_space<vmem>>, vector<8x1xf32>
      tpu.vector_store %arg8[%c0_24, %c0_25], %31 {strides = array<i32>} : memref<8x1xf32, #tpu.memory_space<vmem>>, vector<8x1xf32>,
    } else {
    }
    %c0 = arith.constant 0 : index
    %c0_1 = arith.constant 0 : index
    %3 = vector.load %arg2[%c0, %c0_1] : memref<8x128xbf16, #tpu.memory_space<vmem>>, vector<8x128xbf16>
    %c0_2 = arith.constant 0 : index
    %c0_3 = arith.constant 0 : index
    %4 = vector.load %arg3[%c0_2, %c0_3] : memref<128x128xbf16, #tpu.memory_space<vmem>>, vector<128x128xbf16>
    %cst = arith.constant dense<0.000000e+00> : vector<8x128xf32>
    %5 = tpu.matmul %3, %4, %cst {dimension_numbers = #tpu.dot_dimension_numbers<[1], [0], [0], [1], [0, 0, 1, 1], [], []>} : vector<8x128xbf16>, vector<128x128xbf16>, vector<8x128xf32> -> vector<8x128xf32>
    %c0_4 = arith.constant 0 : index
    %c0_5 = arith.constant 0 : index
    %6 = vector.load %arg4[%c0_4, %c0_5] : memref<1x128xf32, #tpu.memory_space<vmem>>, vector<1x128xf32>
    %7 = vector.broadcast %6 : vector<1x128xf32> to vector<8x128xf32>
    %8 = arith.addf %5, %7 : vector<8x128xf32>
    %c0_6 = arith.constant 0 : index
    %c0_7 = arith.constant 0 : index
    %9 = vector.load %arg5[%c0_6, %c0_7] : memref<8x128xf32, #tpu.memory_space<vmem>>, vector<8x128xf32>
    tpu.vector_store %arg5[%c0_6, %c0_7], %8 {strides = array<i32>} : memref<8x128xf32, #tpu.memory_space<vmem>>, vector<8x128xf32>,
    %c0_8 = arith.constant 0 : index
    %c0_9 = arith.constant 0 : index
    %10 = vector.load %arg7[%c0_8, %c0_9] : memref<8x1xf32, #tpu.memory_space<vmem>>, vector<8x1xf32>
    %cst_10 = arith.constant dense<0xFF800000> : vector<8xf32>
    %11 = vector.multi_reduction <maximumf>, %8, %cst_10 [1] : vector<8x128xf32> to vector<8xf32>
    %12 = vector.shape_cast %11 : vector<8xf32> to vector<8x1xf32>
    %13 = arith.maximumf %10, %12 : vector<8x1xf32>
    %c0_11 = arith.constant 0 : index
    %c0_12 = arith.constant 0 : index
    %14 = vector.load %arg8[%c0_11, %c0_12] : memref<8x1xf32, #tpu.memory_space<vmem>>, vector<8x1xf32>
    %15 = arith.subf %10, %13 : vector<8x1xf32>
    %16 = math.exp %15 : vector<8x1xf32>
    %17 = arith.mulf %14, %16 : vector<8x1xf32>
    %18 = vector.broadcast %13 : vector<8x1xf32> to vector<8x128xf32>
    %19 = arith.subf %8, %18 : vector<8x128xf32>
    %20 = math.exp %19 : vector<8x128xf32>
    %cst_13 = arith.constant dense<0.000000e+00> : vector<8xf32>
    %21 = vector.multi_reduction <add>, %20, %cst_13 [1] : vector<8x128xf32> to vector<8xf32>
    %22 = vector.shape_cast %21 : vector<8xf32> to vector<8x1xf32>
    %23 = arith.addf %17, %22 : vector<8x1xf32>
    %c0_14 = arith.constant 0 : index
    %c0_15 = arith.constant 0 : index
    %24 = vector.load %arg8[%c0_14, %c0_15] : memref<8x1xf32, #tpu.memory_space<vmem>>, vector<8x1xf32>
    tpu.vector_store %arg8[%c0_14, %c0_15], %23 {strides = array<i32>} : memref<8x1xf32, #tpu.memory_space<vmem>>, vector<8x1xf32>,
    %c0_16 = arith.constant 0 : index
    %c0_17 = arith.constant 0 : index
    %25 = vector.load %arg7[%c0_16, %c0_17] : memref<8x1xf32, #tpu.memory_space<vmem>>, vector<8x1xf32>
    tpu.vector_store %arg7[%c0_16, %c0_17], %13 {strides = array<i32>} : memref<8x1xf32, #tpu.memory_space<vmem>>, vector<8x1xf32>,
    %c0_i32_18 = arith.constant 0 : i32
    %26 = arith.cmpi eq, %arg1, %c0_i32_18 : i32
    %27 = arith.extui %26 : i1 to i32
    %c0_i32_19 = arith.constant 0 : i32
    %28 = arith.cmpi ne, %27, %c0_i32_19 : i32
    scf.if %28 {
      %c0_20 = arith.constant 0 : index
      %c0_21 = arith.constant 0 : index
      %29 = vector.load %arg7[%c0_20, %c0_21] : memref<8x1xf32, #tpu.memory_space<vmem>>, vector<8x1xf32>
      %c0_22 = arith.constant 0 : index
      %c0_23 = arith.constant 0 : index
      %30 = vector.load %arg8[%c0_22, %c0_23] : memref<8x1xf32, #tpu.memory_space<vmem>>, vector<8x1xf32>
      %31 = math.log %30 : vector<8x1xf32>
      %32 = arith.addf %29, %31 : vector<8x1xf32>
      %33 = vector.shape_cast %32 : vector<8x1xf32> to vector<1x8x1xf32>
      %c0_24 = arith.constant 0 : index
      %c0_25 = arith.constant 0 : index
      %c0_26 = arith.constant 0 : index
      %34 = vector.load %arg6[%c0_24, %c0_25, %c0_26] : memref<1x8x1xf32, #tpu.memory_space<vmem>>, vector<1x8x1xf32>
      tpu.vector_store %arg6[%c0_24, %c0_25, %c0_26], %33 {strides = array<i32>} : memref<1x8x1xf32, #tpu.memory_space<vmem>>, vector<1x8x1xf32>,
    } else {
    }
    return
  }
  func.func @transform_0(%arg0: i32, %arg1: i32) -> (i32, i32) {
    %c0_i32 = arith.constant 0 : i32
    %c0_i32_0 = arith.constant 0 : i32
    %c0_i32_1 = arith.constant 0 : i32
    return %c0_i32, %c0_i32_0 : i32, i32
  }
  func.func @transform_1(%arg0: i32, %arg1: i32) -> (i32, i32) {
    %c1_i32 = arith.constant 1 : i32
    %0 = arith.muli %arg0, %c1_i32 : i32
    %1 = arith.addi %0, %arg1 : i32
    %c0_i32 = arith.constant 0 : i32
    %c0_i32_0 = arith.constant 0 : i32
    return %c0_i32, %1 : i32, i32
  }
  func.func @transform_2(%arg0: i32, %arg1: i32) -> (i32, i32) {
    %c1_i32 = arith.constant 1 : i32
    %0 = arith.muli %arg0, %c1_i32 : i32
    %1 = arith.addi %0, %arg1 : i32
    %c0_i32 = arith.constant 0 : i32
    %c0_i32_0 = arith.constant 0 : i32
    return %c0_i32, %1 : i32, i32
  }
  func.func @transform_3(%arg0: i32, %arg1: i32) -> (i32, i32) {
    %c1_i32 = arith.constant 1 : i32
    %0 = arith.muli %arg0, %c1_i32 : i32
    %1 = arith.addi %0, %arg1 : i32
    %c0_i32 = arith.constant 0 : i32
    %c0_i32_0 = arith.constant 0 : i32
    return %c0_i32, %1 : i32, i32
  }
  func.func @transform_4(%arg0: i32, %arg1: i32) -> (i32, i32, i32) {
    %c0_i32 = arith.constant 0 : i32
    %c0_i32_0 = arith.constant 0 : i32
    %c0_i32_1 = arith.constant 0 : i32
    return %arg0, %c0_i32, %c0_i32_0 : i32, i32, i32
  }
}

module attributes {stable_mosaic.version = 11 : i64} {
  func.func @gru_attn_kernel(%arg0: i32, %arg1: memref<8x128xf32, #tpu.memory_space<vmem>>, %arg2: memref<8x128xf32, #tpu.memory_space<vmem>>, %arg3: memref<8x8x128xf32, #tpu.memory_space<vmem>>, %arg4: memref<128x384xf32, #tpu.memory_space<vmem>>, %arg5: memref<128x384xf32, #tpu.memory_space<vmem>>, %arg6: memref<1x384xf32, #tpu.memory_space<vmem>>, %arg7: memref<1x384xf32, #tpu.memory_space<vmem>>, %arg8: memref<128x128xf32, #tpu.memory_space<vmem>>, %arg9: memref<128x128xf32, #tpu.memory_space<vmem>>, %arg10: memref<128x128xf32, #tpu.memory_space<vmem>>, %arg11: memref<1x128xf32, #tpu.memory_space<vmem>>, %arg12: memref<8x128xf32, #tpu.memory_space<vmem>>, %arg13: memref<8x128xbf16, #tpu.memory_space<vmem>>) attributes {dimension_semantics = [#tpu.dimension_semantics<arbitrary>], iteration_bounds = array<i64: 1>, scalar_prefetch = 0 : i64, scratch_operands = 0 : i64, tpu.core_type = #tpu.core_type<tc>, window_params = [{pipeline_mode = #tpu.pipeline_mode<synchronous>, transform_indices = @transform_0, window_bounds = array<i64: 8, 128>}, {pipeline_mode = #tpu.pipeline_mode<synchronous>, transform_indices = @transform_1, window_bounds = array<i64: 8, 128>}, {pipeline_mode = #tpu.pipeline_mode<synchronous>, transform_indices = @transform_2, window_bounds = array<i64: 8, 8, 128>}, {pipeline_mode = #tpu.pipeline_mode<synchronous>, transform_indices = @transform_3, window_bounds = array<i64: 128, 384>}, {pipeline_mode = #tpu.pipeline_mode<synchronous>, transform_indices = @transform_4, window_bounds = array<i64: 128, 384>}, {pipeline_mode = #tpu.pipeline_mode<synchronous>, transform_indices = @transform_5, window_bounds = array<i64: 1, 384>}, {pipeline_mode = #tpu.pipeline_mode<synchronous>, transform_indices = @transform_6, window_bounds = array<i64: 1, 384>}, {pipeline_mode = #tpu.pipeline_mode<synchronous>, transform_indices = @transform_7, window_bounds = array<i64: 128, 128>}, {pipeline_mode = #tpu.pipeline_mode<synchronous>, transform_indices = @transform_8, window_bounds = array<i64: 128, 128>}, {pipeline_mode = #tpu.pipeline_mode<synchronous>, transform_indices = @transform_9, window_bounds = array<i64: 128, 128>}, {pipeline_mode = #tpu.pipeline_mode<synchronous>, transform_indices = @transform_10, window_bounds = array<i64: 1, 128>}, {pipeline_mode = #tpu.pipeline_mode<synchronous>, transform_indices = @transform_11, window_bounds = array<i64: 8, 128>}, {pipeline_mode = #tpu.pipeline_mode<synchronous>, transform_indices = @transform_12, window_bounds = array<i64: 8, 128>}]} {
    %c0 = arith.constant 0 : index
    %c0_0 = arith.constant 0 : index
    %0 = vector.load %arg1[%c0, %c0_0] : memref<8x128xf32, #tpu.memory_space<vmem>>, vector<8x128xf32>
    %c0_1 = arith.constant 0 : index
    %c0_2 = arith.constant 0 : index
    %1 = vector.load %arg2[%c0_1, %c0_2] : memref<8x128xf32, #tpu.memory_space<vmem>>, vector<8x128xf32>
    %c0_3 = arith.constant 0 : index
    %c0_4 = arith.constant 0 : index
    %2 = vector.load %arg4[%c0_3, %c0_4] : memref<128x384xf32, #tpu.memory_space<vmem>>, vector<128x384xf32>
    %cst = arith.constant dense<0.000000e+00> : vector<8x384xf32>
    %3 = tpu.matmul %0, %2, %cst {dimension_numbers = #tpu.dot_dimension_numbers<[1], [0], [0], [1], [0, 0, 1, 1], [], []>} : vector<8x128xf32>, vector<128x384xf32>, vector<8x384xf32> -> vector<8x384xf32>
    %c0_5 = arith.constant 0 : index
    %c0_6 = arith.constant 0 : index
    %4 = vector.load %arg6[%c0_5, %c0_6] : memref<1x384xf32, #tpu.memory_space<vmem>>, vector<1x384xf32>
    %5 = vector.broadcast %4 : vector<1x384xf32> to vector<8x384xf32>
    %6 = arith.addf %3, %5 : vector<8x384xf32>
    %c0_7 = arith.constant 0 : index
    %c0_8 = arith.constant 0 : index
    %7 = vector.load %arg5[%c0_7, %c0_8] : memref<128x384xf32, #tpu.memory_space<vmem>>, vector<128x384xf32>
    %cst_9 = arith.constant dense<0.000000e+00> : vector<8x384xf32>
    %8 = tpu.matmul %1, %7, %cst_9 {dimension_numbers = #tpu.dot_dimension_numbers<[1], [0], [0], [1], [0, 0, 1, 1], [], []>} : vector<8x128xf32>, vector<128x384xf32>, vector<8x384xf32> -> vector<8x384xf32>
    %c0_10 = arith.constant 0 : index
    %c0_11 = arith.constant 0 : index
    %9 = vector.load %arg7[%c0_10, %c0_11] : memref<1x384xf32, #tpu.memory_space<vmem>>, vector<1x384xf32>
    %10 = vector.broadcast %9 : vector<1x384xf32> to vector<8x384xf32>
    %11 = arith.addf %8, %10 : vector<8x384xf32>
    %12 = vector.extract_strided_slice %6 {offsets = [0, 0], sizes = [8, 128], strides = [1, 1]} : vector<8x384xf32> to vector<8x128xf32>
    %13 = vector.extract_strided_slice %11 {offsets = [0, 0], sizes = [8, 128], strides = [1, 1]} : vector<8x384xf32> to vector<8x128xf32>
    %14 = arith.addf %12, %13 : vector<8x128xf32>
    %15 = arith.negf %14 : vector<8x128xf32>
    %16 = math.exp %15 : vector<8x128xf32>
    %cst_12 = arith.constant 1.000000e+00 : f32
    %17 = vector.broadcast %cst_12 : f32 to vector<8x128xf32>
    %18 = arith.addf %17, %16 : vector<8x128xf32>
    %19 = arith.divf %17, %18 : vector<8x128xf32>
    %20 = vector.extract_strided_slice %6 {offsets = [0, 128], sizes = [8, 128], strides = [1, 1]} : vector<8x384xf32> to vector<8x128xf32>
    %21 = vector.extract_strided_slice %11 {offsets = [0, 128], sizes = [8, 128], strides = [1, 1]} : vector<8x384xf32> to vector<8x128xf32>
    %22 = arith.addf %20, %21 : vector<8x128xf32>
    %23 = arith.negf %22 : vector<8x128xf32>
    %24 = math.exp %23 : vector<8x128xf32>
    %cst_13 = arith.constant 1.000000e+00 : f32
    %25 = vector.broadcast %cst_13 : f32 to vector<8x128xf32>
    %26 = arith.addf %25, %24 : vector<8x128xf32>
    %27 = arith.divf %25, %26 : vector<8x128xf32>
    %28 = vector.extract_strided_slice %6 {offsets = [0, 256], sizes = [8, 128], strides = [1, 1]} : vector<8x384xf32> to vector<8x128xf32>
    %29 = vector.extract_strided_slice %11 {offsets = [0, 256], sizes = [8, 128], strides = [1, 1]} : vector<8x384xf32> to vector<8x128xf32>
    %30 = arith.mulf %19, %29 : vector<8x128xf32>
    %31 = arith.addf %28, %30 : vector<8x128xf32>
    %32 = math.tanh %31 : vector<8x128xf32>
    %cst_14 = arith.constant 1.000000e+00 : f32
    %33 = vector.broadcast %cst_14 : f32 to vector<8x128xf32>
    %34 = arith.subf %33, %27 : vector<8x128xf32>
    %35 = arith.mulf %34, %32 : vector<8x128xf32>
    %36 = arith.mulf %27, %1 : vector<8x128xf32>
    %37 = arith.addf %35, %36 : vector<8x128xf32>
    %c0_15 = arith.constant 0 : index
    %c0_16 = arith.constant 0 : index
    %38 = vector.load %arg12[%c0_15, %c0_16] : memref<8x128xf32, #tpu.memory_space<vmem>>, vector<8x128xf32>
    tpu.vector_store %arg12[%c0_15, %c0_16], %37 {strides = array<i32>} : memref<8x128xf32, #tpu.memory_space<vmem>>, vector<8x128xf32>,
    %c0_17 = arith.constant 0 : index
    %c0_18 = arith.constant 0 : index
    %c0_19 = arith.constant 0 : index
    %39 = vector.load %arg3[%c0_17, %c0_18, %c0_19] : memref<8x8x128xf32, #tpu.memory_space<vmem>>, vector<8x8x128xf32>
    %c0_20 = arith.constant 0 : index
    %c0_21 = arith.constant 0 : index
    %40 = vector.load %arg8[%c0_20, %c0_21] : memref<128x128xf32, #tpu.memory_space<vmem>>, vector<128x128xf32>
    %cst_22 = arith.constant dense<0.000000e+00> : vector<8x128xf32>
    %41 = tpu.matmul %37, %40, %cst_22 {dimension_numbers = #tpu.dot_dimension_numbers<[1], [0], [0], [1], [0, 0, 1, 1], [], []>} : vector<8x128xf32>, vector<128x128xf32>, vector<8x128xf32> -> vector<8x128xf32>
    %42 = vector.shape_cast %41 : vector<8x128xf32> to vector<8x1x128xf32>
    "tpu.trace_start"() <{level = 10 : i32, message = "bqh,bsh->bqs"}> : () -> ()
    %cst_23 = arith.constant dense<0.000000e+00> : vector<8x1x8xf32>
    %43 = tpu.matmul %42, %39, %cst_23 {dimension_numbers = #tpu.dot_dimension_numbers<[2], [2], [1], [1], [0, 0, 0, 1, 1, 1], [0], [0]>} : vector<8x1x128xf32>, vector<8x8x128xf32>, vector<8x1x8xf32> -> vector<8x1x8xf32>
    "tpu.trace_stop"() : () -> ()
    %cst_24 = arith.constant dense<0xFF800000> : vector<8x1xf32>
    %44 = vector.multi_reduction <maximumf>, %43, %cst_24 [2] : vector<8x1x8xf32> to vector<8x1xf32>
    %45 = vector.shape_cast %44 : vector<8x1xf32> to vector<8x1x1xf32>
    %46 = vector.broadcast %45 : vector<8x1x1xf32> to vector<8x1x8xf32>
    %47 = arith.subf %43, %46 : vector<8x1x8xf32>
    %48 = math.exp %47 : vector<8x1x8xf32>
    %cst_25 = arith.constant dense<0.000000e+00> : vector<8x1xf32>
    %49 = vector.multi_reduction <add>, %48, %cst_25 [2] : vector<8x1x8xf32> to vector<8x1xf32>
    %50 = vector.shape_cast %49 : vector<8x1xf32> to vector<8x1x1xf32>
    %51 = vector.broadcast %50 : vector<8x1x1xf32> to vector<8x1x8xf32>
    %52 = arith.divf %48, %51 : vector<8x1x8xf32>
    "tpu.trace_start"() <{level = 10 : i32, message = "bqs,bsh->bqh"}> : () -> ()
    %cst_26 = arith.constant dense<0.000000e+00> : vector<8x1x128xf32>
    %53 = tpu.matmul %52, %39, %cst_26 {dimension_numbers = #tpu.dot_dimension_numbers<[2], [1], [1], [2], [0, 0, 0, 1, 1, 2], [0], [0]>} : vector<8x1x8xf32>, vector<8x8x128xf32>, vector<8x1x128xf32> -> vector<8x1x128xf32>
    "tpu.trace_stop"() : () -> ()
    %54 = vector.shape_cast %53 : vector<8x1x128xf32> to vector<8x128xf32>
    %c0_27 = arith.constant 0 : index
    %c0_28 = arith.constant 0 : index
    %55 = vector.load %arg9[%c0_27, %c0_28] : memref<128x128xf32, #tpu.memory_space<vmem>>, vector<128x128xf32>
    %cst_29 = arith.constant dense<0.000000e+00> : vector<8x128xf32>
    %56 = tpu.matmul %54, %55, %cst_29 {dimension_numbers = #tpu.dot_dimension_numbers<[1], [0], [0], [1], [0, 0, 1, 1], [], []>} : vector<8x128xf32>, vector<128x128xf32>, vector<8x128xf32> -> vector<8x128xf32>
    %c0_30 = arith.constant 0 : index
    %c0_31 = arith.constant 0 : index
    %57 = vector.load %arg10[%c0_30, %c0_31] : memref<128x128xf32, #tpu.memory_space<vmem>>, vector<128x128xf32>
    %cst_32 = arith.constant dense<0.000000e+00> : vector<8x128xf32>
    %58 = tpu.matmul %37, %57, %cst_32 {dimension_numbers = #tpu.dot_dimension_numbers<[1], [0], [0], [1], [0, 0, 1, 1], [], []>} : vector<8x128xf32>, vector<128x128xf32>, vector<8x128xf32> -> vector<8x128xf32>
    %59 = arith.addf %56, %58 : vector<8x128xf32>
    %c0_33 = arith.constant 0 : index
    %c0_34 = arith.constant 0 : index
    %60 = vector.load %arg11[%c0_33, %c0_34] : memref<1x128xf32, #tpu.memory_space<vmem>>, vector<1x128xf32>
    %61 = vector.broadcast %60 : vector<1x128xf32> to vector<8x128xf32>
    %62 = arith.addf %59, %61 : vector<8x128xf32>
    %63 = math.tanh %62 : vector<8x128xf32>
    %64 = arith.truncf %63 : vector<8x128xf32> to vector<8x128xbf16>
    %c0_35 = arith.constant 0 : index
    %c0_36 = arith.constant 0 : index
    %65 = vector.load %arg13[%c0_35, %c0_36] : memref<8x128xbf16, #tpu.memory_space<vmem>>, vector<8x128xbf16>
    tpu.vector_store %arg13[%c0_35, %c0_36], %64 {strides = array<i32>} : memref<8x128xbf16, #tpu.memory_space<vmem>>, vector<8x128xbf16>,
    return
  }
  func.func @transform_0(%arg0: i32) -> (i32, i32) {
    %c0_i32 = arith.constant 0 : i32
    %c0_i32_0 = arith.constant 0 : i32
    %c0_i32_1 = arith.constant 0 : i32
    return %c0_i32, %c0_i32_0 : i32, i32
  }
  func.func @transform_1(%arg0: i32) -> (i32, i32) {
    %c0_i32 = arith.constant 0 : i32
    %c0_i32_0 = arith.constant 0 : i32
    %c0_i32_1 = arith.constant 0 : i32
    return %c0_i32, %c0_i32_0 : i32, i32
  }
  func.func @transform_2(%arg0: i32) -> (i32, i32, i32) {
    %c0_i32 = arith.constant 0 : i32
    %c0_i32_0 = arith.constant 0 : i32
    %c0_i32_1 = arith.constant 0 : i32
    %c0_i32_2 = arith.constant 0 : i32
    return %c0_i32, %c0_i32_0, %c0_i32_1 : i32, i32, i32
  }
  func.func @transform_3(%arg0: i32) -> (i32, i32) {
    %c0_i32 = arith.constant 0 : i32
    %c0_i32_0 = arith.constant 0 : i32
    %c0_i32_1 = arith.constant 0 : i32
    return %c0_i32, %c0_i32_0 : i32, i32
  }
  func.func @transform_4(%arg0: i32) -> (i32, i32) {
    %c0_i32 = arith.constant 0 : i32
    %c0_i32_0 = arith.constant 0 : i32
    %c0_i32_1 = arith.constant 0 : i32
    return %c0_i32, %c0_i32_0 : i32, i32
  }
  func.func @transform_5(%arg0: i32) -> (i32, i32) {
    %c0_i32 = arith.constant 0 : i32
    %c0_i32_0 = arith.constant 0 : i32
    %c0_i32_1 = arith.constant 0 : i32
    return %c0_i32, %c0_i32_0 : i32, i32
  }
  func.func @transform_6(%arg0: i32) -> (i32, i32) {
    %c0_i32 = arith.constant 0 : i32
    %c0_i32_0 = arith.constant 0 : i32
    %c0_i32_1 = arith.constant 0 : i32
    return %c0_i32, %c0_i32_0 : i32, i32
  }
  func.func @transform_7(%arg0: i32) -> (i32, i32) {
    %c0_i32 = arith.constant 0 : i32
    %c0_i32_0 = arith.constant 0 : i32
    %c0_i32_1 = arith.constant 0 : i32
    return %c0_i32, %c0_i32_0 : i32, i32
  }
  func.func @transform_8(%arg0: i32) -> (i32, i32) {
    %c0_i32 = arith.constant 0 : i32
    %c0_i32_0 = arith.constant 0 : i32
    %c0_i32_1 = arith.constant 0 : i32
    return %c0_i32, %c0_i32_0 : i32, i32
  }
  func.func @transform_9(%arg0: i32) -> (i32, i32) {
    %c0_i32 = arith.constant 0 : i32
    %c0_i32_0 = arith.constant 0 : i32
    %c0_i32_1 = arith.constant 0 : i32
    return %c0_i32, %c0_i32_0 : i32, i32
  }
  func.func @transform_10(%arg0: i32) -> (i32, i32) {
    %c0_i32 = arith.constant 0 : i32
    %c0_i32_0 = arith.constant 0 : i32
    %c0_i32_1 = arith.constant 0 : i32
    return %c0_i32, %c0_i32_0 : i32, i32
  }
  func.func @transform_11(%arg0: i32) -> (i32, i32) {
    %c0_i32 = arith.constant 0 : i32
    %c0_i32_0 = arith.constant 0 : i32
    %c0_i32_1 = arith.constant 0 : i32
    return %c0_i32, %c0_i32_0 : i32, i32
  }
  func.func @transform_12(%arg0: i32) -> (i32, i32) {
    %c0_i32 = arith.constant 0 : i32
    %c0_i32_0 = arith.constant 0 : i32
    %c0_i32_1 = arith.constant 0 : i32
    return %c0_i32, %c0_i32_0 : i32, i32
  }
}

</mosaic_0001>

<llo_original>
// kernel: decoder_gru_attn_step.3
$region0: #{decoder_gru_attn_step.3}
  #allocation0 [shape = 'u32[]', space=smem, size = 0x4, offset = 0x4, fixed_abs, tag = 'smem constant byte address 0x4 - core index']
  #allocation1 [shape = 'u32[72,128]{1,0:T(1,128)}', space=vmem, size = 0x9000, scoped, tag = 'internal scratch']
  #allocation2 [shape = 'f32[8,1]{1,0:T(8,128)}', space=vmem, size = 0x1000, scoped, tag = 'scratch operand']
  #allocation3 [shape = 'f32[8,1]{1,0:T(8,128)}', space=vmem, size = 0x1000, scoped, tag = 'scratch operand']
  %s0 = inlined_call_operand.vmem [shape: bf16[8,128], index: 0, kind: input, shape index: {}]
  %s1 = inlined_call_operand.hbm [shape: bf16[128,256], index: 1, kind: input, shape index: {}]
  %s2 = inlined_call_operand.vmem [shape: f32[1,256], index: 2, kind: input, shape index: {}]
  %s3 = inlined_call_operand.vmem [shape: f32[8,256], index: 3, kind: output, shape index: {0}]
  %s4 = inlined_call_operand.vmem [shape: f32[2,8,1], index: 4, kind: output, shape index: {1}]
  %5 = xla_tuple %s3, %s4
  %s6 = sld [smem:[#allocation0]]
  $region65: #{decoder_gru_attn_step.3} parent=0
    _
  %s8 = ssub.s32 1, %s6
  %s9 = scalar_select 0, %s8, %s6
  $region1: #{decoder_gru_attn_step.3} parent=0
    #allocation4 [shape = 'u8[65536]{0}', space=vmem, size = 0x10000, scoped, tag = 'input window, operand 1']
    #allocation5 [shape = 's32[2]{0}', space=sflag, size = 0x8, scoped, tag = 'scoped memory for decoder_gru_attn_step.3']
    %10 = vsyncpa [#allocation5], 0
    %s11 = scalar_lea.sflag [#allocation5], 1
    %12 = vsyncpa %s11, 0
    loop: start=0, step=1, limit=4
    $region2: #{decoder_gru_attn_step.3} parent=1 // loop_pre_header
      _
    $region3: #{decoder_gru_attn_step.3} parent=1 // loop_header
      %s14 = sphi 0, %s18
      %p15 = scmp.ge.s32.totalorder %s14, 4
      %s21 = sphi 0, %s33
      %s22 = sphi 0, %s29
      %s23 = sphi 0, %s21
      %s24 = sphi 0, %s22
      %s25 = sphi 0, %s23
      %s26 = sphi 0, %s24
      %s34 = sphi 0, %s34
      %s36 = sphi 0, %s34
      %s37 = sphi 0, %s36
      %s51 = sphi 0, %s37
      %s59 = sphi 0, %s61
      %s62 = sphi 0, %s59
      %s63 = sphi 0, %s62
      %s79 = sphi 0, %s63
      %s87 = sphi 0, %s89
      %s90 = sphi 0, %s87
      %s91 = sphi 0, %s90
      %s107 = sphi 0, %s91
      %s115 = sphi 0, %s117
      %s118 = sphi 0, %s115
      %s119 = sphi 0, %s118
      %s135 = sphi 0, %s119
      %s141 = sphi 0, %s143
      %s144 = sphi 0, %s141
      %s145 = sphi 0, %s144
      %s161 = sphi 0, %s145
    $region4: #{decoder_gru_attn_step.3} parent=1 // loop_header_branch
      %17 = sbr.rel (%p15) target = $region8
    $region5: #{decoder_gru_attn_step.3} parent=1 // loop_body
      %s19 = ssub.s32 %s14, 1
      %s20 = ssub.s32 %s14, 2
      %s27 = sadd.s32 1, %s22
      %p28 = scmp.ge.s32.totalorder %s27, 1
      %s29 = scalar_select %p28, 0, %s27
      %s30 = sadd.s32 1, %s21
      %s31 = scalar_select %p28, %s30, %s21
      %p32 = scmp.ge.s32.totalorder %s31, 2
      %s33 = scalar_select %p32, 0, %s31
      %s35 = sadd.s32 %s34, 1
      %p38 = scmp.eq.s32.totalorder %s14, 1
      %p39 = scmp.ne.s32.totalorder %s34, %s36
      %p40 = scmp.eq.s32.totalorder %s14, 0
      %p41 = por %p39, %p40
      %p42 = scmp.ne.s32.totalorder %s34, %s36
      %p43 = scmp.eq.s32.totalorder %s19, 1
      %p44 = por %p42, %p43
      %p45 = scmp.ne.s32.totalorder %s36, %s37
      %p46 = scmp.eq.s32.totalorder %s19, 0
      %p47 = por %p45, %p46
      %p48 = scmp.ne.s32.totalorder %s36, %s37
      %p49 = scmp.eq.s32.totalorder %s20, 1
      %p50 = por %p48, %p49
      %p52 = scmp.ne.s32.totalorder %s37, %s51
      %p53 = scmp.eq.s32.totalorder %s20, 0
      %p54 = por %p52, %p53
      %s55 = sadd.s32 %s21, %s22
      %s56 = sadd.s32 %s33, %s29
      %s57 = ssub.s32 %s55, %s56
      %p58 = scmp.eq.s32.totalorder %s57, 0
      %s60 = sadd.s32 %s59, 1
      %s61 = scalar_select %p58, %s59, %s60
      %p64 = pneg %p58
      %p65 = scmp.eq.s32.totalorder %s14, 1
      %p66 = por %p64, %p65
      %p67 = scmp.ne.s32.totalorder %s59, %s62
      %p68 = scmp.eq.s32.totalorder %s14, 0
      %p69 = por %p67, %p68
      %p70 = scmp.ne.s32.totalorder %s59, %s62
      %p71 = scmp.eq.s32.totalorder %s19, 1
      %p72 = por %p70, %p71
      %p73 = scmp.ne.s32.totalorder %s62, %s63
      %p74 = scmp.eq.s32.totalorder %s19, 0
      %p75 = por %p73, %p74
      %p76 = scmp.ne.s32.totalorder %s62, %s63
      %p77 = scmp.eq.s32.totalorder %s20, 1
      %p78 = por %p76, %p77
      %p80 = scmp.ne.s32.totalorder %s63, %s79
      %p81 = scmp.eq.s32.totalorder %s20, 0
      %p82 = por %p80, %p81
      %s83 = sadd.s32 %s21, %s22
      %s84 = sadd.s32 %s33, %s29
      %s85 = ssub.s32 %s83, %s84
      %p86 = scmp.eq.s32.totalorder %s85, 0
      %s88 = sadd.s32 %s87, 1
      %s89 = scalar_select %p86, %s87, %s88
      %p92 = pneg %p86
      %p93 = scmp.eq.s32.totalorder %s14, 1
      %p94 = por %p92, %p93
      %p95 = scmp.ne.s32.totalorder %s87, %s90
      %p96 = scmp.eq.s32.totalorder %s14, 0
      %p97 = por %p95, %p96
      %p98 = scmp.ne.s32.totalorder %s87, %s90
      %p99 = scmp.eq.s32.totalorder %s19, 1
      %p100 = por %p98, %p99
      %p101 = scmp.ne.s32.totalorder %s90, %s91
      %p102 = scmp.eq.s32.totalorder %s19, 0
      %p103 = por %p101, %p102
      %p104 = scmp.ne.s32.totalorder %s90, %s91
      %p105 = scmp.eq.s32.totalorder %s20, 1
      %p106 = por %p104, %p105
      %p108 = scmp.ne.s32.totalorder %s91, %s107
      %p109 = scmp.eq.s32.totalorder %s20, 0
      %p110 = por %p108, %p109
      %s111 = sadd.s32 %s21, %s22
      %s112 = sadd.s32 %s33, %s29
      %s113 = ssub.s32 %s111, %s112
      %p114 = scmp.eq.s32.totalorder %s113, 0
      %s116 = sadd.s32 %s115, 1
      %s117 = scalar_select %p114, %s115, %s116
      %p120 = pneg %p114
      %p121 = scmp.eq.s32.totalorder %s14, 1
      %p122 = por %p120, %p121
      %p123 = scmp.ne.s32.totalorder %s115, %s118
      %p124 = scmp.eq.s32.totalorder %s14, 0
      %p125 = por %p123, %p124
      %p126 = scmp.ne.s32.totalorder %s115, %s118
      %p127 = scmp.eq.s32.totalorder %s19, 1
      %p128 = por %p126, %p127
      %p129 = scmp.ne.s32.totalorder %s118, %s119
      %p130 = scmp.eq.s32.totalorder %s19, 0
      %p131 = por %p129, %p130
      %p132 = scmp.ne.s32.totalorder %s118, %s119
      %p133 = scmp.eq.s32.totalorder %s20, 1
      %p134 = por %p132, %p133
      %p136 = scmp.ne.s32.totalorder %s119, %s135
      %p137 = scmp.eq.s32.totalorder %s20, 0
      %p138 = por %p136, %p137
      %s139 = ssub.s32 %s21, %s33
      %p140 = scmp.eq.s32.totalorder %s139, 0
      %s142 = sadd.s32 %s141, 1
      %s143 = scalar_select %p140, %s141, %s142
      %p146 = pneg %p140
      %p147 = scmp.eq.s32.totalorder %s14, 1
      %p148 = por %p146, %p147
      %p149 = scmp.ne.s32.totalorder %s141, %s144
      %p150 = scmp.eq.s32.totalorder %s14, 0
      %p151 = por %p149, %p150
      %p152 = scmp.ne.s32.totalorder %s141, %s144
      %p153 = scmp.eq.s32.totalorder %s19, 1
      %p154 = por %p152, %p153
      %p155 = scmp.ne.s32.totalorder %s144, %s145
      %p156 = scmp.eq.s32.totalorder %s19, 0
      %p157 = por %p155, %p156
      %p158 = scmp.ne.s32.totalorder %s144, %s145
      %p159 = scmp.eq.s32.totalorder %s20, 1
      %p160 = por %p158, %p159
      %p162 = scmp.ne.s32.totalorder %s145, %s161
      %p163 = scmp.eq.s32.totalorder %s20, 0
      %p164 = por %p162, %p163
      %p165 = scmp.le.s32.totalorder 1, %s14
      %p166 = scmp.lt.s32.totalorder %s14, 3
      %p167 = pnand %p165, %p166
      %p168 = pneg %p167
      // Predicated region
      $region9: #{decoder_gru_attn_step.3} parent=5 // pred_check
        _
      $region10: #{decoder_gru_attn_step.3} parent=5 // pred_check_branch
        %170 = sbr.rel (%p167) target = $region12
      $region11: #{decoder_gru_attn_step.3} parent=5 // pred_region
        %s171 = ssub.s32 %s14, 1
        // Predicated region
        $region13: #{decoder_gru_attn_step.3} parent=11 // pred_check
          %p172 = pneg %p47
        $region14: #{decoder_gru_attn_step.3} parent=11 // pred_check_branch
          %174 = sbr.rel (%p172) target = $region16
        $region15: #{decoder_gru_attn_step.3} parent=11 // pred_region
          _
        $region16: #{decoder_gru_attn_step.3} parent=11 // pred_fallthru
          _
      $region12: #{decoder_gru_attn_step.3} parent=5 // pred_fallthru
        _
      %p175 = scmp.lt.s32.totalorder %s14, 2
      // Predicated region
      $region17: #{decoder_gru_attn_step.3} parent=5 // pred_check
        %p176 = pneg %p175
      $region18: #{decoder_gru_attn_step.3} parent=5 // pred_check_branch
        %178 = sbr.rel (%p176) target = $region20
      $region19: #{decoder_gru_attn_step.3} parent=5 // pred_region
        // Predicated region
        $region21: #{decoder_gru_attn_step.3} parent=19 // pred_check
          %p179 = pneg %p69
        $region22: #{decoder_gru_attn_step.3} parent=19 // pred_check_branch
          %181 = sbr.rel (%p179) target = $region24
        $region23: #{decoder_gru_attn_step.3} parent=19 // pred_region
          %s182 = sand.u32 %s59, 1
          %s183 = scalar_lea.sflag [#allocation5], %s182
          %s184 = sand.u32 %s59, 1
          %s185 = smul.addr %s184, 64
          %s186 = scalar_lea.vmem [#allocation4], %s185
          %s187 = sadd.s32 %s21, %s22
          %189 = vsyncadd %s183, 0
          %s190 = smul.addr %s187, 4
          %s191 = scalar_lea.hbm %s1, %s190
          %s192 = sshll.u32 %s191, 4
          %s193 = int_to_ptr.hbm [resolvable:$true] %s192
          %s194 = sshll.u32 %s186, 4
          %s195 = int_to_ptr.vmem [resolvable:$true] %s194
          %200 = dma.hbm_to_vmem [thread:$0]  %s193, 1024, %s195, %s183, 128, 64, 4
        $region24: #{decoder_gru_attn_step.3} parent=19 // pred_fallthru
          _
        // Predicated region
        $region25: #{decoder_gru_attn_step.3} parent=19 // pred_check
          %p201 = pneg %p97
        $region26: #{decoder_gru_attn_step.3} parent=19 // pred_check_branch
          %203 = sbr.rel (%p201) target = $region28
        $region27: #{decoder_gru_attn_step.3} parent=19 // pred_region
          %s204 = sadd.s32 %s21, %s22
          %p205 = scmp.lt.s32.totalorder %s204, 1
          %s206 = scalar_select %p205, %s204, 1
          %s207 = scalar_lea.vmem %s2, %s206
          %s208 = sadd.s32 %s21, %s22
        $region28: #{decoder_gru_attn_step.3} parent=19 // pred_fallthru
          _
      $region20: #{decoder_gru_attn_step.3} parent=5 // pred_fallthru
        _
      %p209 = scmp.le.s32.totalorder 1, %s14
      %p210 = scmp.lt.s32.totalorder %s14, 3
      %p211 = pnand %p209, %p210
      %p212 = pneg %p211
      // Predicated region
      $region29: #{decoder_gru_attn_step.3} parent=5 // pred_check
        _
      $region30: #{decoder_gru_attn_step.3} parent=5 // pred_check_branch
        %214 = sbr.rel (%p211) target = $region32
      $region31: #{decoder_gru_attn_step.3} parent=5 // pred_region
        %s215 = ssub.s32 %s14, 1
        %s216 = sand.u32 %s62, 1
        %s217 = scalar_lea.sflag [#allocation5], %s216
        %s218 = sand.u32 %s62, 1
        %s219 = smul.addr %s218, 64
        %s220 = scalar_lea.vmem [#allocation4], %s219
        // Predicated region
        $region33: #{decoder_gru_attn_step.3} parent=31 // pred_check
          %p221 = pneg %p75
        $region34: #{decoder_gru_attn_step.3} parent=31 // pred_check_branch
          %223 = sbr.rel (%p221) target = $region36
        $region35: #{decoder_gru_attn_step.3} parent=31 // pred_region
          %225 = dma.done %s217, 1024
        $region36: #{decoder_gru_attn_step.3} parent=31 // pred_fallthru
          _
        %p226 = pneg %p47
        %p227 = pneg %p44
        %s228 = sand.u32 %s62, 1
        %s229 = scalar_lea.sflag [#allocation5], %s228
        %s230 = sand.u32 %s62, 1
        %s231 = smul.addr %s230, 64
        %s232 = scalar_lea.vmem [#allocation4], %s231
        %p233 = pneg %p75
        %p234 = pneg %p72
        %s235 = sadd.s32 %s23, %s24
        %p236 = scmp.lt.s32.totalorder %s235, 1
        %s237 = scalar_select %p236, %s235, 1
        %s238 = scalar_lea.vmem %s2, %s237
        %p239 = pneg %p103
        %p240 = pneg %p100
        %p241 = pneg %p131
        %p242 = pneg %p128
        %s243 = sadd.s32 %s23, %s24
        %p244 = scmp.lt.s32.totalorder %s243, 1
        %s245 = scalar_select %p244, %s243, 1
        %s246 = smul.addr %s245, 8
        %s247 = scalar_lea.vmem %s3, %s246
        %p248 = pneg %p157
        %p249 = pneg %p154
        %p250 = scmp.lt.s32.totalorder %s23, 1
        %s251 = scalar_select %p250, %s23, 1
        %s252 = smul.addr %s251, 8
        %s253 = scalar_lea.vmem %s4, %s252
        %s254 = sadd.s32 %s23, %s24
        %s255 = sadd.s32 %s23, %s24
        %p256 = scmp.lt.s32.totalorder %s255, 1
        %s257 = scalar_select %p256, %s255, 1
        %s258 = scalar_lea.vmem %s2, %s257
        %s259 = sadd.s32 %s23, %s24
        %s260 = sadd.s32 %s23, %s24
        %p261 = scmp.lt.s32.totalorder %s260, 1
        %s262 = scalar_select %p261, %s260, 1
        %s263 = smul.addr %s262, 8
        %s264 = scalar_lea.vmem %s3, %s263
        %s265 = sadd.s32 %s23, %s24
        %p266 = scmp.lt.s32.totalorder %s23, 1
        %s267 = scalar_select %p266, %s23, 1
        %s268 = smul.addr %s267, 8
        %s269 = scalar_lea.vmem %s4, %s268
        %p270 = scmp.eq.s32.totalorder %s24, 0
        // Predicated region
        $region37: #{decoder_gru_attn_step.3} parent=31 // pred_check
          %p271 = pneg %p270
        $region38: #{decoder_gru_attn_step.3} parent=31 // pred_check_branch
          %273 = sbr.rel (%p271) target = $region40
        $region39: #{decoder_gru_attn_step.3} parent=31 // pred_region
          %vm274 = vcmask 7168
          %275 = vst.msk [vmem:[#allocation2] sm:$0xff] %vm274, -inf
          %276 = vst.msk [vmem:[#allocation3] sm:$0xff] %vm274, 0.0
        $region40: #{decoder_gru_attn_step.3} parent=31 // pred_fallthru
          _
        %v277 = vld [vmem:[%s0] sm:$0xf]
        %v278 = vld [vmem:[%s220] sm:$0xf]
        %v279 = vld [vmem:[%s220 + $0x4] sm:$0xf]
        %v280 = vld [vmem:[%s220 + $0x8] sm:$0xf]
        %v281 = vld [vmem:[%s220 + $0xc] sm:$0xf]
        %v282 = vld [vmem:[%s220 + $0x10] sm:$0xf]
        %v283 = vld [vmem:[%s220 + $0x14] sm:$0xf]
        %v284 = vld [vmem:[%s220 + $0x18] sm:$0xf]
        %v285 = vld [vmem:[%s220 + $0x1c] sm:$0xf]
        %v286 = vld [vmem:[%s220 + $0x20] sm:$0xf]
        %v287 = vld [vmem:[%s220 + $0x24] sm:$0xf]
        %v288 = vld [vmem:[%s220 + $0x28] sm:$0xf]
        %v289 = vld [vmem:[%s220 + $0x2c] sm:$0xf]
        %v290 = vld [vmem:[%s220 + $0x30] sm:$0xf]
        %v291 = vld [vmem:[%s220 + $0x34] sm:$0xf]
        %v292 = vld [vmem:[%s220 + $0x38] sm:$0xf]
        %v293 = vld [vmem:[%s220 + $0x3c] sm:$0xf]
        %v294 = vld [vmem:[%s258] sm:$0x1]
        %v296 = vperm.slane %v294, 0
        %v314 = vunpack.c.l.b16 %v278
        %v315 = vunpack.c.l.b16 %v279
        %v316 = vunpack.c.l.b16 %v280
        %v317 = vunpack.c.l.b16 %v281
        %v318 = vunpack.c.l.b16 %v282
        %v319 = vunpack.c.l.b16 %v283
        %v320 = vunpack.c.l.b16 %v284
        %v321 = vunpack.c.l.b16 %v285
        %v322 = vunpack.c.l.b16 %v286
        %v323 = vunpack.c.l.b16 %v287
        %v324 = vunpack.c.l.b16 %v288
        %v325 = vunpack.c.l.b16 %v289
        %v326 = vunpack.c.l.b16 %v290
        %v327 = vunpack.c.l.b16 %v291
        %v328 = vunpack.c.l.b16 %v292
        %v329 = vunpack.c.l.b16 %v293
        %v330 = vpack.c.b16 %v315, %v314
        %v331 = vpack.c.b16 %v317, %v316
        %v332 = vpack.c.b16 %v319, %v318
        %v333 = vpack.c.b16 %v321, %v320
        %v334 = vpack.c.b16 %v323, %v322
        %v335 = vpack.c.b16 %v325, %v324
        %v336 = vpack.c.b16 %v327, %v326
        %v337 = vpack.c.b16 %v329, %v328
        %346 = vmatpush.bf16.msra.mxu0 %v337
        %347 = vmatpush.bf16.msra.mxu0 %v336
        %348 = vmatpush.bf16.msra.mxu0 %v335
        %349 = vmatpush.bf16.msra.mxu0 %v334
        %350 = vmatpush.bf16.msra.mxu0 %v333
        %351 = vmatpush.bf16.msra.mxu0 %v332
        %352 = vmatpush.bf16.msra.mxu0 %v331
        %353 = vmatpush.bf16.msra.mxu0 %v330
        %354 = vmatmul.bf16.gmra.mxu0 %v277
        %v355 = vpop.f32.mrf.mxu0
        %v356 = vadd.f32 %v296, %v355
        %v357 = vpop.f32.mrf.mxu0
        %358 = vdwg.mxu0
        %359 = vst [vmem:[%s264] sm:$0xff] %v356
        %v360 = vld [vmem:[#allocation2] sm:$0xff]
        %361 = vmax.xlane.f32.xlu0 %v356
        %v362 = vpop.xlane.xlu0 %361
        %v363 = vmax.f32 %v360, %v362
        %v364 = vld [vmem:[#allocation3] sm:$0xff]
        %v365 = vsub.f32 %v360, %v363
        %v366 = vmul.f32 %v365, 1.442695
        %v367 = vpow.pop %v366
        %v368 = vmul.f32 %v364, %v367
        %370 = vset.pattern.permute.xlu0 0
        %371 = vperm.xlu0 %370, %v363
        %v372 = vpop.permute.xlu0 %371
        %v374 = vsub.f32 %v356, %v372
        %v375 = vmul.f32 %v374, 1.442695
        %v376 = vpow.pop %v375
        %377 = vadd.xlane.f32.xlu0 %v376
        %v378 = vpop.xlane.xlu0 %377
        %v379 = vadd.f32 %v368, %v378
        %vm380 = vcmask 7168
        %381 = vst.msk [vmem:[#allocation3] sm:$0xff] %vm380, %v379
        %382 = vst.msk [vmem:[#allocation2] sm:$0xff] %vm380, %v363
        // Predicated region
        $region41: #{decoder_gru_attn_step.3} parent=31 // pred_check
          %p383 = pneg %p270
        $region42: #{decoder_gru_attn_step.3} parent=31 // pred_check_branch
          %385 = sbr.rel (%p383) target = $region44
        $region43: #{decoder_gru_attn_step.3} parent=31 // pred_region
          %v386 = vld [vmem:[#allocation2] sm:$0xff]
          %v387 = vld [vmem:[#allocation3] sm:$0xff]
          %v388 = vlog2.pop %v387
          %v389 = vmul.f32 %v388, 0.6931472
          %v390 = vadd.f32 %v386, %v389
          %391 = vst.msk [vmem:[%s269] sm:$0xff] %vm380, %v390
        $region44: #{decoder_gru_attn_step.3} parent=31 // pred_fallthru
          _
        %s392 = sadd.s32 %s23, %s24
        %p393 = scmp.lt.s32.totalorder %s392, 1
        %s394 = scalar_select %p393, %s392, 1
        %s395 = smul.addr %s394, 8
        %s396 = scalar_lea.vmem %s3, %s395
        %p397 = scmp.lt.s32.totalorder %s23, 1
        %s398 = scalar_select %p397, %s23, 1
        %s399 = smul.addr %s398, 8
        %s400 = scalar_lea.vmem %s4, %s399
        // Predicated region
        $region45: #{decoder_gru_attn_step.3} parent=31 // pred_check
          %p401 = pneg %p128
        $region46: #{decoder_gru_attn_step.3} parent=31 // pred_check_branch
          %403 = sbr.rel (%p401) target = $region48
        $region47: #{decoder_gru_attn_step.3} parent=31 // pred_region
          %s404 = sadd.s32 %s23, %s24
        $region48: #{decoder_gru_attn_step.3} parent=31 // pred_fallthru
          _
        // Predicated region
        $region49: #{decoder_gru_attn_step.3} parent=31 // pred_check
          %p405 = pneg %p154
        $region50: #{decoder_gru_attn_step.3} parent=31 // pred_check_branch
          %407 = sbr.rel (%p405) target = $region52
        $region51: #{decoder_gru_attn_step.3} parent=31 // pred_region
          _
        $region52: #{decoder_gru_attn_step.3} parent=31 // pred_fallthru
          _
      $region32: #{decoder_gru_attn_step.3} parent=5 // pred_fallthru
        _
      %p408 = scmp.le.s32.totalorder 2, %s14
      // Predicated region
      $region53: #{decoder_gru_attn_step.3} parent=5 // pred_check
        %p409 = pneg %p408
      $region54: #{decoder_gru_attn_step.3} parent=5 // pred_check_branch
        %411 = sbr.rel (%p409) target = $region56
      $region55: #{decoder_gru_attn_step.3} parent=5 // pred_region
        %s412 = ssub.s32 %s14, 2
        // Predicated region
        $region57: #{decoder_gru_attn_step.3} parent=55 // pred_check
          %p413 = pneg %p134
        $region58: #{decoder_gru_attn_step.3} parent=55 // pred_check_branch
          %415 = sbr.rel (%p413) target = $region60
        $region59: #{decoder_gru_attn_step.3} parent=55 // pred_region
          %s416 = sadd.s32 %s25, %s26
          %p417 = scmp.lt.s32.totalorder %s416, 1
          %s418 = scalar_select %p417, %s416, 1
          %s419 = smul.addr %s418, 8
          %s420 = scalar_lea.vmem %s3, %s419
        $region60: #{decoder_gru_attn_step.3} parent=55 // pred_fallthru
          _
        // Predicated region
        $region61: #{decoder_gru_attn_step.3} parent=55 // pred_check
          %p421 = pneg %p160
        $region62: #{decoder_gru_attn_step.3} parent=55 // pred_check_branch
          %423 = sbr.rel (%p421) target = $region64
        $region63: #{decoder_gru_attn_step.3} parent=55 // pred_region
          %p424 = scmp.lt.s32.totalorder %s25, 1
          %s425 = scalar_select %p424, %s25, 1
          %s426 = smul.addr %s425, 8
          %s427 = scalar_lea.vmem %s4, %s426
        $region64: #{decoder_gru_attn_step.3} parent=55 // pred_fallthru
          _
      $region56: #{decoder_gru_attn_step.3} parent=5 // pred_fallthru
        _
    $region6: #{decoder_gru_attn_step.3} parent=1 // loop_footer
      %s18 = sadd.s32 1, %s14
    $region7: #{decoder_gru_attn_step.3} parent=1 // loop_footer_branch
      %13 = sbr.rel target = $region3
    $region8: #{decoder_gru_attn_step.3} parent=1 // loop_exit
      _
    %428 = vsyncpa [#allocation5], 1
    %s429 = scalar_lea.sflag [#allocation5], 1
    %430 = vsyncpa %s429, 1

// kernel: decoder_gru_attn_step.2
$region0: #{decoder_gru_attn_step.2}
  #allocation0 [shape = 'u32[]', space=smem, size = 0x4, offset = 0x4, fixed_abs, tag = 'smem constant byte address 0x4 - core index']
  #allocation1 [shape = 'u32[72,128]{1,0:T(1,128)}', space=vmem, size = 0x9000, scoped, tag = 'internal scratch']
  %s0 = inlined_call_operand.vmem [shape: f32[8,128], index: 0, kind: input, shape index: {}]
  %s1 = inlined_call_operand.vmem [shape: f32[8,128], index: 1, kind: input, shape index: {}]
  %s2 = inlined_call_operand.vmem [shape: f32[8,8,128], index: 2, kind: input, shape index: {}]
  %s3 = inlined_call_operand.hbm [shape: f32[128,384], index: 3, kind: input, shape index: {}]
  %s4 = inlined_call_operand.hbm [shape: f32[128,384], index: 4, kind: input, shape index: {}]
  %s5 = inlined_call_operand.vmem [shape: f32[1,384], index: 5, kind: input, shape index: {}]
  %s6 = inlined_call_operand.vmem [shape: f32[1,384], index: 6, kind: input, shape index: {}]
  %s7 = inlined_call_operand.hbm [shape: f32[128,128], index: 7, kind: input, shape index: {}]
  %s8 = inlined_call_operand.hbm [shape: f32[128,128], index: 8, kind: input, shape index: {}]
  %s9 = inlined_call_operand.hbm [shape: f32[128,128], index: 9, kind: input, shape index: {}]
  %s10 = inlined_call_operand.vmem [shape: f32[1,128], index: 10, kind: input, shape index: {}]
  %s11 = inlined_call_operand.vmem [shape: f32[8,128], index: 11, kind: output, shape index: {0}]
  %s12 = inlined_call_operand.vmem [shape: bf16[8,128], index: 12, kind: output, shape index: {1}]
  %13 = xla_tuple %s11, %s12
  %s14 = sld [smem:[#allocation0]]
  $region82: #{decoder_gru_attn_step.2} parent=0
    _
  %s16 = ssub.s32 1, %s14
  %s17 = scalar_select 0, %s16, %s14
  $region1: #{decoder_gru_attn_step.2} parent=0
    #allocation2 [shape = 'u8[196608]{0}', space=vmem, size = 0x30000, scoped, tag = 'input window, operand 3, single buffered']
    #allocation3 [shape = 's32[1]{0}', space=sflag, size = 0x4, scoped, tag = 'scoped memory for decoder_gru_attn_step.2']
    #allocation4 [shape = 'u8[196608]{0}', space=vmem, size = 0x30000, scoped, tag = 'input window, operand 4, single buffered']
    #allocation5 [shape = 's32[1]{0}', space=sflag, size = 0x4, scoped, tag = 'scoped memory for decoder_gru_attn_step.2']
    #allocation6 [shape = 'u8[65536]{0}', space=vmem, size = 0x10000, scoped, tag = 'input window, operand 7, single buffered']
    #allocation7 [shape = 'u8[65536]{0}', space=vmem, size = 0x10000, scoped, tag = 'input window, operand 8, single buffered']
    #allocation8 [shape = 's32[1]{0}', space=sflag, size = 0x4, scoped, tag = 'scoped memory for decoder_gru_attn_step.2']
    #allocation9 [shape = 'u8[65536]{0}', space=vmem, size = 0x10000, scoped, tag = 'input window, operand 9, single buffered']
    %18 = vsyncpa [#allocation3], 0
    %19 = vsyncpa [#allocation5], 0
    %20 = vsyncpa [#allocation8], 0
    // Predicated region
    $region2: #{decoder_gru_attn_step.2} parent=1 // pred_check
      _
    $region3: #{decoder_gru_attn_step.2} parent=1 // pred_check_branch
      %22 = sbr.rel (0) target = $region5
    $region4: #{decoder_gru_attn_step.2} parent=1 // pred_region
      _
    $region5: #{decoder_gru_attn_step.2} parent=1 // pred_fallthru
      _
    // Predicated region
    $region6: #{decoder_gru_attn_step.2} parent=1 // pred_check
      _
    $region7: #{decoder_gru_attn_step.2} parent=1 // pred_check_branch
      %24 = sbr.rel (0) target = $region9
    $region8: #{decoder_gru_attn_step.2} parent=1 // pred_region
      _
    $region9: #{decoder_gru_attn_step.2} parent=1 // pred_fallthru
      _
    // Predicated region
    $region10: #{decoder_gru_attn_step.2} parent=1 // pred_check
      _
    $region11: #{decoder_gru_attn_step.2} parent=1 // pred_check_branch
      %26 = sbr.rel (0) target = $region13
    $region12: #{decoder_gru_attn_step.2} parent=1 // pred_region
      _
    $region13: #{decoder_gru_attn_step.2} parent=1 // pred_fallthru
      _
    // Predicated region
    $region14: #{decoder_gru_attn_step.2} parent=1 // pred_check
      _
    $region15: #{decoder_gru_attn_step.2} parent=1 // pred_check_branch
      %28 = sbr.rel (0) target = $region17
    $region16: #{decoder_gru_attn_step.2} parent=1 // pred_region
      %30 = vsyncadd [#allocation3], 0
      %s31 = sshll.u32 %s3, 4
      %s32 = int_to_ptr.hbm [resolvable:$true] %s31
      %s33 = sshll.u32 [#allocation2], 4
      %s34 = int_to_ptr.vmem [resolvable:$true] %s33
      %39 = dma.hbm_to_vmem [thread:$0]  %s32, 6144, %s34, [#allocation3], 384, 384, 24
    $region17: #{decoder_gru_attn_step.2} parent=1 // pred_fallthru
      _
    // Predicated region
    $region18: #{decoder_gru_attn_step.2} parent=1 // pred_check
      _
    $region19: #{decoder_gru_attn_step.2} parent=1 // pred_check_branch
      %41 = sbr.rel (0) target = $region21
    $region20: #{decoder_gru_attn_step.2} parent=1 // pred_region
      %43 = vsyncadd [#allocation5], 0
      %s44 = sshll.u32 %s4, 4
      %s45 = int_to_ptr.hbm [resolvable:$true] %s44
      %s46 = sshll.u32 [#allocation4], 4
      %s47 = int_to_ptr.vmem [resolvable:$true] %s46
      %52 = dma.hbm_to_vmem [thread:$0]  %s45, 6144, %s47, [#allocation5], 384, 384, 24
    $region21: #{decoder_gru_attn_step.2} parent=1 // pred_fallthru
      _
    // Predicated region
    $region22: #{decoder_gru_attn_step.2} parent=1 // pred_check
      _
    $region23: #{decoder_gru_attn_step.2} parent=1 // pred_check_branch
      %54 = sbr.rel (0) target = $region25
    $region24: #{decoder_gru_attn_step.2} parent=1 // pred_region
      _
    $region25: #{decoder_gru_attn_step.2} parent=1 // pred_fallthru
      _
    // Predicated region
    $region26: #{decoder_gru_attn_step.2} parent=1 // pred_check
      _
    $region27: #{decoder_gru_attn_step.2} parent=1 // pred_check_branch
      %56 = sbr.rel (0) target = $region29
    $region28: #{decoder_gru_attn_step.2} parent=1 // pred_region
      _
    $region29: #{decoder_gru_attn_step.2} parent=1 // pred_fallthru
      _
    // Predicated region
    $region30: #{decoder_gru_attn_step.2} parent=1 // pred_check
      _
    $region31: #{decoder_gru_attn_step.2} parent=1 // pred_check_branch
      %58 = sbr.rel (0) target = $region33
    $region32: #{decoder_gru_attn_step.2} parent=1 // pred_region
      %60 = vsyncadd [#allocation5], 0
      %s61 = sshll.u32 %s7, 4
      %s62 = int_to_ptr.hbm [resolvable:$true] %s61
      %s63 = sshll.u32 [#allocation6], 4
      %s64 = int_to_ptr.vmem [resolvable:$true] %s63
      %69 = dma.hbm_to_vmem [thread:$0]  %s62, 2048, %s64, [#allocation5], 128, 128, 8
    $region33: #{decoder_gru_attn_step.2} parent=1 // pred_fallthru
      _
    // Predicated region
    $region34: #{decoder_gru_attn_step.2} parent=1 // pred_check
      _
    $region35: #{decoder_gru_attn_step.2} parent=1 // pred_check_branch
      %71 = sbr.rel (0) target = $region37
    $region36: #{decoder_gru_attn_step.2} parent=1 // pred_region
      %73 = vsyncadd [#allocation8], 0
      %s74 = sshll.u32 %s8, 4
      %s75 = int_to_ptr.hbm [resolvable:$true] %s74
      %s76 = sshll.u32 [#allocation7], 4
      %s77 = int_to_ptr.vmem [resolvable:$true] %s76
      %82 = dma.hbm_to_vmem [thread:$0]  %s75, 2048, %s77, [#allocation8], 128, 128, 8
    $region37: #{decoder_gru_attn_step.2} parent=1 // pred_fallthru
      _
    // Predicated region
    $region38: #{decoder_gru_attn_step.2} parent=1 // pred_check
      _
    $region39: #{decoder_gru_attn_step.2} parent=1 // pred_check_branch
      %84 = sbr.rel (0) target = $region41
    $region40: #{decoder_gru_attn_step.2} parent=1 // pred_region
      %86 = vsyncadd [#allocation8], 0
      %s87 = sshll.u32 %s9, 4
      %s88 = int_to_ptr.hbm [resolvable:$true] %s87
      %s89 = sshll.u32 [#allocation9], 4
      %s90 = int_to_ptr.vmem [resolvable:$true] %s89
      %95 = dma.hbm_to_vmem [thread:$0]  %s88, 2048, %s90, [#allocation8], 128, 128, 8
    $region41: #{decoder_gru_attn_step.2} parent=1 // pred_fallthru
      _
    // Predicated region
    $region42: #{decoder_gru_attn_step.2} parent=1 // pred_check
      _
    $region43: #{decoder_gru_attn_step.2} parent=1 // pred_check_branch
      %97 = sbr.rel (0) target = $region45
    $region44: #{decoder_gru_attn_step.2} parent=1 // pred_region
      _
    $region45: #{decoder_gru_attn_step.2} parent=1 // pred_fallthru
      _
    // Predicated region
    $region46: #{decoder_gru_attn_step.2} parent=1 // pred_check
      _
    $region47: #{decoder_gru_attn_step.2} parent=1 // pred_check_branch
      %99 = sbr.rel (0) target = $region49
    $region48: #{decoder_gru_attn_step.2} parent=1 // pred_region
      %101 = dma.done [#allocation3], 6144
    $region49: #{decoder_gru_attn_step.2} parent=1 // pred_fallthru
      _
    // Predicated region
    $region50: #{decoder_gru_attn_step.2} parent=1 // pred_check
      _
    $region51: #{decoder_gru_attn_step.2} parent=1 // pred_check_branch
      %103 = sbr.rel (0) target = $region53
    $region52: #{decoder_gru_attn_step.2} parent=1 // pred_region
      %105 = dma.done [#allocation5], 6144
    $region53: #{decoder_gru_attn_step.2} parent=1 // pred_fallthru
      _
    // Predicated region
    $region54: #{decoder_gru_attn_step.2} parent=1 // pred_check
      _
    $region55: #{decoder_gru_attn_step.2} parent=1 // pred_check_branch
      %107 = sbr.rel (0) target = $region57
    $region56: #{decoder_gru_attn_step.2} parent=1 // pred_region
      %109 = dma.done [#allocation5], 2048
    $region57: #{decoder_gru_attn_step.2} parent=1 // pred_fallthru
      _
    // Predicated region
    $region58: #{decoder_gru_attn_step.2} parent=1 // pred_check
      _
    $region59: #{decoder_gru_attn_step.2} parent=1 // pred_check_branch
      %111 = sbr.rel (0) target = $region61
    $region60: #{decoder_gru_attn_step.2} parent=1 // pred_region
      %113 = dma.done [#allocation8], 2048
    $region61: #{decoder_gru_attn_step.2} parent=1 // pred_fallthru
      _
    // Predicated region
    $region62: #{decoder_gru_attn_step.2} parent=1 // pred_check
      _
    $region63: #{decoder_gru_attn_step.2} parent=1 // pred_check_branch
      %115 = sbr.rel (0) target = $region65
    $region64: #{decoder_gru_attn_step.2} parent=1 // pred_region
      %117 = dma.done [#allocation8], 2048
    $region65: #{decoder_gru_attn_step.2} parent=1 // pred_fallthru
      _
    %v118 = vld [vmem:[%s0] sm:$0xff]
    %v119 = vld [vmem:[%s1] sm:$0xff]
    %v120 = vld [vmem:[#allocation2] sm:$0xff]
    %v121 = vld [vmem:[#allocation2 + $0x8] sm:$0xff]
    %v122 = vld [vmem:[#allocation2 + $0x10] sm:$0xff]
    %v123 = vld [vmem:[#allocation2 + $0x18] sm:$0xff]
    %v124 = vld [vmem:[#allocation2 + $0x20] sm:$0xff]
    %v125 = vld [vmem:[#allocation2 + $0x28] sm:$0xff]
    %v126 = vld [vmem:[#allocation2 + $0x30] sm:$0xff]
    %v127 = vld [vmem:[#allocation2 + $0x38] sm:$0xff]
    %v128 = vld [vmem:[#allocation2 + $0x40] sm:$0xff]
    %v129 = vld [vmem:[#allocation2 + $0x48] sm:$0xff]
    %v130 = vld [vmem:[#allocation2 + $0x50] sm:$0xff]
    %v131 = vld [vmem:[#allocation2 + $0x58] sm:$0xff]
    %v132 = vld [vmem:[#allocation2 + $0x60] sm:$0xff]
    %v133 = vld [vmem:[#allocation2 + $0x68] sm:$0xff]
    %v134 = vld [vmem:[#allocation2 + $0x70] sm:$0xff]
    %v135 = vld [vmem:[#allocation2 + $0x78] sm:$0xff]
    %v136 = vld [vmem:[#allocation2 + $0x80] sm:$0xff]
    %v137 = vld [vmem:[#allocation2 + $0x88] sm:$0xff]
    %v138 = vld [vmem:[#allocation2 + $0x90] sm:$0xff]
    %v139 = vld [vmem:[#allocation2 + $0x98] sm:$0xff]
    %v140 = vld [vmem:[#allocation2 + $0xa0] sm:$0xff]
    %v141 = vld [vmem:[#allocation2 + $0xa8] sm:$0xff]
    %v142 = vld [vmem:[#allocation2 + $0xb0] sm:$0xff]
    %v143 = vld [vmem:[#allocation2 + $0xb8] sm:$0xff]
    %v144 = vld [vmem:[#allocation2 + $0xc0] sm:$0xff]
    %v145 = vld [vmem:[#allocation2 + $0xc8] sm:$0xff]
    %v146 = vld [vmem:[#allocation2 + $0xd0] sm:$0xff]
    %v147 = vld [vmem:[#allocation2 + $0xd8] sm:$0xff]
    %v148 = vld [vmem:[#allocation2 + $0xe0] sm:$0xff]
    %v149 = vld [vmem:[#allocation2 + $0xe8] sm:$0xff]
    %v150 = vld [vmem:[#allocation2 + $0xf0] sm:$0xff]
    %v151 = vld [vmem:[#allocation2 + $0xf8] sm:$0xff]
    %v152 = vld [vmem:[#allocation2 + $0x100] sm:$0xff]
    %v153 = vld [vmem:[#allocation2 + $0x108] sm:$0xff]
    %v154 = vld [vmem:[#allocation2 + $0x110] sm:$0xff]
    %v155 = vld [vmem:[#allocation2 + $0x118] sm:$0xff]
    %v156 = vld [vmem:[#allocation2 + $0x120] sm:$0xff]
    %v157 = vld [vmem:[#allocation2 + $0x128] sm:$0xff]
    %v158 = vld [vmem:[#allocation2 + $0x130] sm:$0xff]
    %v159 = vld [vmem:[#allocation2 + $0x138] sm:$0xff]
    %v160 = vld [vmem:[#allocation2 + $0x140] sm:$0xff]
    %v161 = vld [vmem:[#allocation2 + $0x148] sm:$0xff]
    %v162 = vld [vmem:[#allocation2 + $0x150] sm:$0xff]
    %v163 = vld [vmem:[#allocation2 + $0x158] sm:$0xff]
    %v164 = vld [vmem:[#allocation2 + $0x160] sm:$0xff]
    %v165 = vld [vmem:[#allocation2 + $0x168] sm:$0xff]
    %v166 = vld [vmem:[#allocation2 + $0x170] sm:$0xff]
    %v167 = vld [vmem:[#allocation2 + $0x178] sm:$0xff]
    %v168 = vld [vmem:[%s5] sm:$0x7]
    %v170 = vperm.slane %v168, 0
    %v171 = vperm.slane %v168, 1
    %v172 = vperm.slane %v168, 2
    %176 = vmatpush.msra.mxu0 %v165
    %177 = vmatpush.msra.mxu0 %v162
    %178 = vmatpush.msra.mxu0 %v159
    %179 = vmatpush.msra.mxu0 %v156
    %180 = vmatpush.msra.mxu0 %v153
    %181 = vmatpush.msra.mxu0 %v150
    %182 = vmatpush.msra.mxu0 %v147
    %183 = vmatpush.msra.mxu0 %v144
    %184 = vmatpush.msra.mxu0 %v141
    %185 = vmatpush.msra.mxu0 %v138
    %186 = vmatpush.msra.mxu0 %v135
    %187 = vmatpush.msra.mxu0 %v132
    %188 = vmatpush.msra.mxu0 %v129
    %189 = vmatpush.msra.mxu0 %v126
    %190 = vmatpush.msra.mxu0 %v123
    %191 = vmatpush.msra.mxu0 %v120
    %192 = vmatmul.f32.gmra.mxu0 %v118
    %v193 = vpop.f32.mrf.mxu0
    %v194 = vadd.f32 %v170, %v193
    %195 = vdwg.mxu0
    %196 = vmatpush.msra.mxu0 %v166
    %197 = vmatpush.msra.mxu0 %v163
    %198 = vmatpush.msra.mxu0 %v160
    %199 = vmatpush.msra.mxu0 %v157
    %200 = vmatpush.msra.mxu0 %v154
    %201 = vmatpush.msra.mxu0 %v151
    %202 = vmatpush.msra.mxu0 %v148
    %203 = vmatpush.msra.mxu0 %v145
    %204 = vmatpush.msra.mxu0 %v142
    %205 = vmatpush.msra.mxu0 %v139
    %206 = vmatpush.msra.mxu0 %v136
    %207 = vmatpush.msra.mxu0 %v133
    %208 = vmatpush.msra.mxu0 %v130
    %209 = vmatpush.msra.mxu0 %v127
    %210 = vmatpush.msra.mxu0 %v124
    %211 = vmatpush.msra.mxu0 %v121
    %212 = vmatmul.f32.gmra.mxu0 %v118
    %v213 = vpop.f32.mrf.mxu0
    %v214 = vadd.f32 %v171, %v213
    %215 = vdwg.mxu0
    %216 = vmatpush.msra.mxu0 %v167
    %217 = vmatpush.msra.mxu0 %v164
    %218 = vmatpush.msra.mxu0 %v161
    %219 = vmatpush.msra.mxu0 %v158
    %220 = vmatpush.msra.mxu0 %v155
    %221 = vmatpush.msra.mxu0 %v152
    %222 = vmatpush.msra.mxu0 %v149
    %223 = vmatpush.msra.mxu0 %v146
    %224 = vmatpush.msra.mxu0 %v143
    %225 = vmatpush.msra.mxu0 %v140
    %226 = vmatpush.msra.mxu0 %v137
    %227 = vmatpush.msra.mxu0 %v134
    %228 = vmatpush.msra.mxu0 %v131
    %229 = vmatpush.msra.mxu0 %v128
    %230 = vmatpush.msra.mxu0 %v125
    %231 = vmatpush.msra.mxu0 %v122
    %232 = vmatmul.f32.gmra.mxu0 %v118
    %v233 = vpop.f32.mrf.mxu0
    %v234 = vadd.f32 %v172, %v233
    %235 = vdwg.mxu0
    %v236 = vld [vmem:[#allocation4] sm:$0xff]
    %v237 = vld [vmem:[#allocation4 + $0x8] sm:$0xff]
    %v238 = vld [vmem:[#allocation4 + $0x10] sm:$0xff]
    %v239 = vld [vmem:[#allocation4 + $0x18] sm:$0xff]
    %v240 = vld [vmem:[#allocation4 + $0x20] sm:$0xff]
    %v241 = vld [vmem:[#allocation4 + $0x28] sm:$0xff]
    %v242 = vld [vmem:[#allocation4 + $0x30] sm:$0xff]
    %v243 = vld [vmem:[#allocation4 + $0x38] sm:$0xff]
    %v244 = vld [vmem:[#allocation4 + $0x40] sm:$0xff]
    %v245 = vld [vmem:[#allocation4 + $0x48] sm:$0xff]
    %v246 = vld [vmem:[#allocation4 + $0x50] sm:$0xff]
    %v247 = vld [vmem:[#allocation4 + $0x58] sm:$0xff]
    %v248 = vld [vmem:[#allocation4 + $0x60] sm:$0xff]
    %v249 = vld [vmem:[#allocation4 + $0x68] sm:$0xff]
    %v250 = vld [vmem:[#allocation4 + $0x70] sm:$0xff]
    %v251 = vld [vmem:[#allocation4 + $0x78] sm:$0xff]
    %v252 = vld [vmem:[#allocation4 + $0x80] sm:$0xff]
    %v253 = vld [vmem:[#allocation4 + $0x88] sm:$0xff]
    %v254 = vld [vmem:[#allocation4 + $0x90] sm:$0xff]
    %v255 = vld [vmem:[#allocation4 + $0x98] sm:$0xff]
    %v256 = vld [vmem:[#allocation4 + $0xa0] sm:$0xff]
    %v257 = vld [vmem:[#allocation4 + $0xa8] sm:$0xff]
    %v258 = vld [vmem:[#allocation4 + $0xb0] sm:$0xff]
    %v259 = vld [vmem:[#allocation4 + $0xb8] sm:$0xff]
    %v260 = vld [vmem:[#allocation4 + $0xc0] sm:$0xff]
    %v261 = vld [vmem:[#allocation4 + $0xc8] sm:$0xff]
    %v262 = vld [vmem:[#allocation4 + $0xd0] sm:$0xff]
    %v263 = vld [vmem:[#allocation4 + $0xd8] sm:$0xff]
    %v264 = vld [vmem:[#allocation4 + $0xe0] sm:$0xff]
    %v265 = vld [vmem:[#allocation4 + $0xe8] sm:$0xff]
    %v266 = vld [vmem:[#allocation4 + $0xf0] sm:$0xff]
    %v267 = vld [vmem:[#allocation4 + $0xf8] sm:$0xff]
    %v268 = vld [vmem:[#allocation4 + $0x100] sm:$0xff]
    %v269 = vld [vmem:[#allocation4 + $0x108] sm:$0xff]
    %v270 = vld [vmem:[#allocation4 + $0x110] sm:$0xff]
    %v271 = vld [vmem:[#allocation4 + $0x118] sm:$0xff]
    %v272 = vld [vmem:[#allocation4 + $0x120] sm:$0xff]
    %v273 = vld [vmem:[#allocation4 + $0x128] sm:$0xff]
    %v274 = vld [vmem:[#allocation4 + $0x130] sm:$0xff]
    %v275 = vld [vmem:[#allocation4 + $0x138] sm:$0xff]
    %v276 = vld [vmem:[#allocation4 + $0x140] sm:$0xff]
    %v277 = vld [vmem:[#allocation4 + $0x148] sm:$0xff]
    %v278 = vld [vmem:[#allocation4 + $0x150] sm:$0xff]
    %v279 = vld [vmem:[#allocation4 + $0x158] sm:$0xff]
    %v280 = vld [vmem:[#allocation4 + $0x160] sm:$0xff]
    %v281 = vld [vmem:[#allocation4 + $0x168] sm:$0xff]
    %v282 = vld [vmem:[#allocation4 + $0x170] sm:$0xff]
    %v283 = vld [vmem:[#allocation4 + $0x178] sm:$0xff]
    %v284 = vld [vmem:[%s6] sm:$0x7]
    %v286 = vperm.slane %v284, 0
    %v287 = vperm.slane %v284, 1
    %v288 = vperm.slane %v284, 2
    %292 = vmatpush.msra.mxu0 %v281
    %293 = vmatpush.msra.mxu0 %v278
    %294 = vmatpush.msra.mxu0 %v275
    %295 = vmatpush.msra.mxu0 %v272
    %296 = vmatpush.msra.mxu0 %v269
    %297 = vmatpush.msra.mxu0 %v266
    %298 = vmatpush.msra.mxu0 %v263
    %299 = vmatpush.msra.mxu0 %v260
    %300 = vmatpush.msra.mxu0 %v257
    %301 = vmatpush.msra.mxu0 %v254
    %302 = vmatpush.msra.mxu0 %v251
    %303 = vmatpush.msra.mxu0 %v248
    %304 = vmatpush.msra.mxu0 %v245
    %305 = vmatpush.msra.mxu0 %v242
    %306 = vmatpush.msra.mxu0 %v239
    %307 = vmatpush.msra.mxu0 %v236
    %308 = vmatmul.f32.gmra.mxu0 %v119
    %v309 = vpop.f32.mrf.mxu0
    %v310 = vadd.f32 %v286, %v309
    %311 = vdwg.mxu0
    %312 = vmatpush.msra.mxu0 %v282
    %313 = vmatpush.msra.mxu0 %v279
    %314 = vmatpush.msra.mxu0 %v276
    %315 = vmatpush.msra.mxu0 %v273
    %316 = vmatpush.msra.mxu0 %v270
    %317 = vmatpush.msra.mxu0 %v267
    %318 = vmatpush.msra.mxu0 %v264
    %319 = vmatpush.msra.mxu0 %v261
    %320 = vmatpush.msra.mxu0 %v258
    %321 = vmatpush.msra.mxu0 %v255
    %322 = vmatpush.msra.mxu0 %v252
    %323 = vmatpush.msra.mxu0 %v249
    %324 = vmatpush.msra.mxu0 %v246
    %325 = vmatpush.msra.mxu0 %v243
    %326 = vmatpush.msra.mxu0 %v240
    %327 = vmatpush.msra.mxu0 %v237
    %328 = vmatmul.f32.gmra.mxu0 %v119
    %v329 = vpop.f32.mrf.mxu0
    %v330 = vadd.f32 %v287, %v329
    %331 = vdwg.mxu0
    %332 = vmatpush.msra.mxu0 %v283
    %333 = vmatpush.msra.mxu0 %v280
    %334 = vmatpush.msra.mxu0 %v277
    %335 = vmatpush.msra.mxu0 %v274
    %336 = vmatpush.msra.mxu0 %v271
    %337 = vmatpush.msra.mxu0 %v268
    %338 = vmatpush.msra.mxu0 %v265
    %339 = vmatpush.msra.mxu0 %v262
    %340 = vmatpush.msra.mxu0 %v259
    %341 = vmatpush.msra.mxu0 %v256
    %342 = vmatpush.msra.mxu0 %v253
    %343 = vmatpush.msra.mxu0 %v250
    %344 = vmatpush.msra.mxu0 %v247
    %345 = vmatpush.msra.mxu0 %v244
    %346 = vmatpush.msra.mxu0 %v241
    %347 = vmatpush.msra.mxu0 %v238
    %348 = vmatmul.f32.gmra.mxu0 %v119
    %v349 = vpop.f32.mrf.mxu0
    %v350 = vadd.f32 %v288, %v349
    %351 = vdwg.mxu0
    %v352 = vadd.f32 %v194, %v310
    %v353 = vxor.u32 %v352, 2147483648
    %v354 = vmul.f32 %v353, 1.442695
    %v355 = vpow.pop %v354
    %v356 = vadd.f32 %v355, 1.0
    %v357 = vrcp.pop %v356
    %v358 = vmul.f32 %v356, %v357
    %v359 = vsub.f32 1.0, %v358
    %v360 = vmul.f32 %v357, %v359
    %v361 = vadd.f32 %v357, %v360
    %vm362 = vweird.f32 %v356
    %vm363 = vweird.f32 %v357
    %vm364 = vmor %vm362, %vm363
    %v365 = vsel %vm364, %v357, %v361
    %v366 = vand.u32 2147483647, %v356
    %vm367 = vcmp.eq.f32.partialorder %v366, 8.507059e+37
    %v368 = vand.u32 %v356, 2147483648
    %v369 = vor.u32 1.1754944e-38, %v368
    %v370 = vsel %vm367, %v369, %v365
    %v371 = vmul.f32 1.0, %v370
    %v372 = vadd.f32 %v214, %v330
    %v373 = vxor.u32 %v372, 2147483648
    %v374 = vmul.f32 %v373, 1.442695
    %v375 = vpow.pop %v374
    %v376 = vadd.f32 %v375, 1.0
    %v377 = vrcp.pop %v376
    %v378 = vmul.f32 %v376, %v377
    %v379 = vsub.f32 1.0, %v378
    %v380 = vmul.f32 %v377, %v379
    %v381 = vadd.f32 %v377, %v380
    %vm382 = vweird.f32 %v376
    %vm383 = vweird.f32 %v377
    %vm384 = vmor %vm382, %vm383
    %v385 = vsel %vm384, %v377, %v381
    %v386 = vand.u32 2147483647, %v376
    %vm387 = vcmp.eq.f32.partialorder %v386, 8.507059e+37
    %v388 = vand.u32 %v376, 2147483648
    %v389 = vor.u32 1.1754944e-38, %v388
    %v390 = vsel %vm387, %v389, %v385
    %v391 = vmul.f32 1.0, %v390
    %v392 = vmul.f32 %v371, %v350
    %v393 = vadd.f32 %v234, %v392
    %v394 = vtanh.pop %v393
    %v395 = vsub.f32 1.0, %v391
    %v396 = vmul.f32 %v395, %v394
    %v397 = vmul.f32 %v391, %v119
    %v398 = vadd.f32 %v396, %v397
    %399 = vst [vmem:[%s11] sm:$0xff] %v398
    %v400 = vld [vmem:[%s2] sm:$0xff]
    %v401 = vld [vmem:[%s2 + $0x8] sm:$0xff]
    %v402 = vld [vmem:[%s2 + $0x10] sm:$0xff]
    %v403 = vld [vmem:[%s2 + $0x18] sm:$0xff]
    %v404 = vld [vmem:[%s2 + $0x20] sm:$0xff]
    %v405 = vld [vmem:[%s2 + $0x28] sm:$0xff]
    %v406 = vld [vmem:[%s2 + $0x30] sm:$0xff]
    %v407 = vld [vmem:[%s2 + $0x38] sm:$0xff]
    %v408 = vld [vmem:[#allocation6] sm:$0xff]
    %v409 = vld [vmem:[#allocation6 + $0x8] sm:$0xff]
    %v410 = vld [vmem:[#allocation6 + $0x10] sm:$0xff]
    %v411 = vld [vmem:[#allocation6 + $0x18] sm:$0xff]
    %v412 = vld [vmem:[#allocation6 + $0x20] sm:$0xff]
    %v413 = vld [vmem:[#allocation6 + $0x28] sm:$0xff]
    %v414 = vld [vmem:[#allocation6 + $0x30] sm:$0xff]
    %v415 = vld [vmem:[#allocation6 + $0x38] sm:$0xff]
    %v416 = vld [vmem:[#allocation6 + $0x40] sm:$0xff]
    %v417 = vld [vmem:[#allocation6 + $0x48] sm:$0xff]
    %v418 = vld [vmem:[#allocation6 + $0x50] sm:$0xff]
    %v419 = vld [vmem:[#allocation6 + $0x58] sm:$0xff]
    %v420 = vld [vmem:[#allocation6 + $0x60] sm:$0xff]
    %v421 = vld [vmem:[#allocation6 + $0x68] sm:$0xff]
    %v422 = vld [vmem:[#allocation6 + $0x70] sm:$0xff]
    %v423 = vld [vmem:[#allocation6 + $0x78] sm:$0xff]
    %424 = vmatpush.msra.mxu0 %v423
    %425 = vmatpush.msra.mxu0 %v422
    %426 = vmatpush.msra.mxu0 %v421
    %427 = vmatpush.msra.mxu0 %v420
    %428 = vmatpush.msra.mxu0 %v419
    %429 = vmatpush.msra.mxu0 %v418
    %430 = vmatpush.msra.mxu0 %v417
    %431 = vmatpush.msra.mxu0 %v416
    %432 = vmatpush.msra.mxu0 %v415
    %433 = vmatpush.msra.mxu0 %v414
    %434 = vmatpush.msra.mxu0 %v413
    %435 = vmatpush.msra.mxu0 %v412
    %436 = vmatpush.msra.mxu0 %v411
    %437 = vmatpush.msra.mxu0 %v410
    %438 = vmatpush.msra.mxu0 %v409
    %439 = vmatpush.msra.mxu0 %v408
    %440 = vmatmul.f32.gmra.mxu0 %v398
    %v441 = vpop.f32.mrf.mxu0
    %v442 = vadd.f32 0.0, %v441
    %443 = vdwg.mxu0
    %v445 = vrot.slane %v442, 1
    %v446 = vrot.slane %v442, 2
    %v447 = vrot.slane %v442, 3
    %v448 = vrot.slane %v442, 4
    %v449 = vrot.slane %v442, 5
    %v450 = vrot.slane %v442, 6
    %v451 = vrot.slane %v442, 7
    %459 = vmatpush.xpose.msra.mxu0 0.0
    %460 = vmatpush.xpose.msra.mxu0 0.0
    %461 = vmatpush.xpose.msra.mxu0 0.0
    %462 = vmatpush.xpose.msra.mxu0 0.0
    %463 = vmatpush.xpose.msra.mxu0 0.0
    %464 = vmatpush.xpose.msra.mxu0 0.0
    %465 = vmatpush.xpose.msra.mxu0 0.0
    %466 = vmatpush.xpose.msra.mxu0 0.0
    %467 = vmatpush.xpose.msra.mxu0 0.0
    %468 = vmatpush.xpose.msra.mxu0 0.0
    %469 = vmatpush.xpose.msra.mxu0 0.0
    %470 = vmatpush.xpose.msra.mxu0 0.0
    %471 = vmatpush.xpose.msra.mxu0 0.0
    %472 = vmatpush.xpose.msra.mxu0 0.0
    %473 = vmatpush.xpose.msra.mxu0 0.0
    %474 = vmatpush.xpose.msra.mxu0 %v400
    %475 = vmatmul.f32.gmra.mxu0 %v442
    %v476 = vpop.f32.mrf.mxu0
    %v477 = vadd.f32 0.0, %v476
    %478 = vdwg.mxu0
    %479 = vmatpush.xpose.msra.mxu0 0.0
    %480 = vmatpush.xpose.msra.mxu0 0.0
    %481 = vmatpush.xpose.msra.mxu0 0.0
    %482 = vmatpush.xpose.msra.mxu0 0.0
    %483 = vmatpush.xpose.msra.mxu0 0.0
    %484 = vmatpush.xpose.msra.mxu0 0.0
    %485 = vmatpush.xpose.msra.mxu0 0.0
    %486 = vmatpush.xpose.msra.mxu0 0.0
    %487 = vmatpush.xpose.msra.mxu0 0.0
    %488 = vmatpush.xpose.msra.mxu0 0.0
    %489 = vmatpush.xpose.msra.mxu0 0.0
    %490 = vmatpush.xpose.msra.mxu0 0.0
    %491 = vmatpush.xpose.msra.mxu0 0.0
    %492 = vmatpush.xpose.msra.mxu0 0.0
    %493 = vmatpush.xpose.msra.mxu0 0.0
    %494 = vmatpush.xpose.msra.mxu0 %v401
    %495 = vmatmul.f32.gmra.mxu0 %v445
    %v496 = vpop.f32.mrf.mxu0
    %v497 = vadd.f32 0.0, %v496
    %498 = vdwg.mxu0
    %499 = vmatpush.xpose.msra.mxu0 0.0
    %500 = vmatpush.xpose.msra.mxu0 0.0
    %501 = vmatpush.xpose.msra.mxu0 0.0
    %502 = vmatpush.xpose.msra.mxu0 0.0
    %503 = vmatpush.xpose.msra.mxu0 0.0
    %504 = vmatpush.xpose.msra.mxu0 0.0
    %505 = vmatpush.xpose.msra.mxu0 0.0
    %506 = vmatpush.xpose.msra.mxu0 0.0
    %507 = vmatpush.xpose.msra.mxu0 0.0
    %508 = vmatpush.xpose.msra.mxu0 0.0
    %509 = vmatpush.xpose.msra.mxu0 0.0
    %510 = vmatpush.xpose.msra.mxu0 0.0
    %511 = vmatpush.xpose.msra.mxu0 0.0
    %512 = vmatpush.xpose.msra.mxu0 0.0
    %513 = vmatpush.xpose.msra.mxu0 0.0
    %514 = vmatpush.xpose.msra.mxu0 %v402
    %515 = vmatmul.f32.gmra.mxu0 %v446
    %v516 = vpop.f32.mrf.mxu0
    %v517 = vadd.f32 0.0, %v516
    %518 = vdwg.mxu0
    %519 = vmatpush.xpose.msra.mxu0 0.0
    %520 = vmatpush.xpose.msra.mxu0 0.0
    %521 = vmatpush.xpose.msra.mxu0 0.0
    %522 = vmatpush.xpose.msra.mxu0 0.0
    %523 = vmatpush.xpose.msra.mxu0 0.0
    %524 = vmatpush.xpose.msra.mxu0 0.0
    %525 = vmatpush.xpose.msra.mxu0 0.0
    %526 = vmatpush.xpose.msra.mxu0 0.0
    %527 = vmatpush.xpose.msra.mxu0 0.0
    %528 = vmatpush.xpose.msra.mxu0 0.0
    %529 = vmatpush.xpose.msra.mxu0 0.0
    %530 = vmatpush.xpose.msra.mxu0 0.0
    %531 = vmatpush.xpose.msra.mxu0 0.0
    %532 = vmatpush.xpose.msra.mxu0 0.0
    %533 = vmatpush.xpose.msra.mxu0 0.0
    %534 = vmatpush.xpose.msra.mxu0 %v403
    %535 = vmatmul.f32.gmra.mxu0 %v447
    %v536 = vpop.f32.mrf.mxu0
    %v537 = vadd.f32 0.0, %v536
    %538 = vdwg.mxu0
    %539 = vmatpush.xpose.msra.mxu0 0.0
    %540 = vmatpush.xpose.msra.mxu0 0.0
    %541 = vmatpush.xpose.msra.mxu0 0.0
    %542 = vmatpush.xpose.msra.mxu0 0.0
    %543 = vmatpush.xpose.msra.mxu0 0.0
    %544 = vmatpush.xpose.msra.mxu0 0.0
    %545 = vmatpush.xpose.msra.mxu0 0.0
    %546 = vmatpush.xpose.msra.mxu0 0.0
    %547 = vmatpush.xpose.msra.mxu0 0.0
    %548 = vmatpush.xpose.msra.mxu0 0.0
    %549 = vmatpush.xpose.msra.mxu0 0.0
    %550 = vmatpush.xpose.msra.mxu0 0.0
    %551 = vmatpush.xpose.msra.mxu0 0.0
    %552 = vmatpush.xpose.msra.mxu0 0.0
    %553 = vmatpush.xpose.msra.mxu0 0.0
    %554 = vmatpush.xpose.msra.mxu0 %v404
    %555 = vmatmul.f32.gmra.mxu0 %v448
    %v556 = vpop.f32.mrf.mxu0
    %v557 = vadd.f32 0.0, %v556
    %558 = vdwg.mxu0
    %559 = vmatpush.xpose.msra.mxu0 0.0
    %560 = vmatpush.xpose.msra.mxu0 0.0
    %561 = vmatpush.xpose.msra.mxu0 0.0
    %562 = vmatpush.xpose.msra.mxu0 0.0
    %563 = vmatpush.xpose.msra.mxu0 0.0
    %564 = vmatpush.xpose.msra.mxu0 0.0
    %565 = vmatpush.xpose.msra.mxu0 0.0
    %566 = vmatpush.xpose.msra.mxu0 0.0
    %567 = vmatpush.xpose.msra.mxu0 0.0
    %568 = vmatpush.xpose.msra.mxu0 0.0
    %569 = vmatpush.xpose.msra.mxu0 0.0
    %570 = vmatpush.xpose.msra.mxu0 0.0
    %571 = vmatpush.xpose.msra.mxu0 0.0
    %572 = vmatpush.xpose.msra.mxu0 0.0
    %573 = vmatpush.xpose.msra.mxu0 0.0
    %574 = vmatpush.xpose.msra.mxu0 %v405
    %575 = vmatmul.f32.gmra.mxu0 %v449
    %v576 = vpop.f32.mrf.mxu0
    %v577 = vadd.f32 0.0, %v576
    %578 = vdwg.mxu0
    %579 = vmatpush.xpose.msra.mxu0 0.0
    %580 = vmatpush.xpose.msra.mxu0 0.0
    %581 = vmatpush.xpose.msra.mxu0 0.0
    %582 = vmatpush.xpose.msra.mxu0 0.0
    %583 = vmatpush.xpose.msra.mxu0 0.0
    %584 = vmatpush.xpose.msra.mxu0 0.0
    %585 = vmatpush.xpose.msra.mxu0 0.0
    %586 = vmatpush.xpose.msra.mxu0 0.0
    %587 = vmatpush.xpose.msra.mxu0 0.0
    %588 = vmatpush.xpose.msra.mxu0 0.0
    %589 = vmatpush.xpose.msra.mxu0 0.0
    %590 = vmatpush.xpose.msra.mxu0 0.0
    %591 = vmatpush.xpose.msra.mxu0 0.0
    %592 = vmatpush.xpose.msra.mxu0 0.0
    %593 = vmatpush.xpose.msra.mxu0 0.0
    %594 = vmatpush.xpose.msra.mxu0 %v406
    %595 = vmatmul.f32.gmra.mxu0 %v450
    %v596 = vpop.f32.mrf.mxu0
    %v597 = vadd.f32 0.0, %v596
    %598 = vdwg.mxu0
    %599 = vmatpush.xpose.msra.mxu0 0.0
    %600 = vmatpush.xpose.msra.mxu0 0.0
    %601 = vmatpush.xpose.msra.mxu0 0.0
    %602 = vmatpush.xpose.msra.mxu0 0.0
    %603 = vmatpush.xpose.msra.mxu0 0.0
    %604 = vmatpush.xpose.msra.mxu0 0.0
    %605 = vmatpush.xpose.msra.mxu0 0.0
    %606 = vmatpush.xpose.msra.mxu0 0.0
    %607 = vmatpush.xpose.msra.mxu0 0.0
    %608 = vmatpush.xpose.msra.mxu0 0.0
    %609 = vmatpush.xpose.msra.mxu0 0.0
    %610 = vmatpush.xpose.msra.mxu0 0.0
    %611 = vmatpush.xpose.msra.mxu0 0.0
    %612 = vmatpush.xpose.msra.mxu0 0.0
    %613 = vmatpush.xpose.msra.mxu0 0.0
    %614 = vmatpush.xpose.msra.mxu0 %v407
    %615 = vmatmul.f32.gmra.mxu0 %v451
    %v616 = vpop.f32.mrf.mxu0
    %v617 = vadd.f32 0.0, %v616
    %618 = vdwg.mxu0
    %vm619 = vcmask 57344
    %v620 = vsel %vm619, %v477, -inf
    %621 = vmax.xlane.f32.xlu0 %v620
    %v622 = vpop.xlane.xlu0 %621
    %v623 = vsel %vm619, %v497, -inf
    %624 = vmax.xlane.f32.xlu0 %v623
    %v625 = vpop.xlane.xlu0 %624
    %v626 = vsel %vm619, %v517, -inf
    %627 = vmax.xlane.f32.xlu0 %v626
    %v628 = vpop.xlane.xlu0 %627
    %v629 = vsel %vm619, %v537, -inf
    %630 = vmax.xlane.f32.xlu0 %v629
    %v631 = vpop.xlane.xlu0 %630
    %v632 = vsel %vm619, %v557, -inf
    %633 = vmax.xlane.f32.xlu0 %v632
    %v634 = vpop.xlane.xlu0 %633
    %v635 = vsel %vm619, %v577, -inf
    %636 = vmax.xlane.f32.xlu0 %v635
    %v637 = vpop.xlane.xlu0 %636
    %v638 = vsel %vm619, %v597, -inf
    %639 = vmax.xlane.f32.xlu0 %v638
    %v640 = vpop.xlane.xlu0 %639
    %v641 = vsel %vm619, %v617, -inf
    %642 = vmax.xlane.f32.xlu0 %v641
    %v643 = vpop.xlane.xlu0 %642
    %v644 = vsub.f32 %v477, %v622
    %v645 = vsub.f32 %v497, %v625
    %v646 = vsub.f32 %v517, %v628
    %v647 = vsub.f32 %v537, %v631
    %v648 = vsub.f32 %v557, %v634
    %v649 = vsub.f32 %v577, %v637
    %v650 = vsub.f32 %v597, %v640
    %v651 = vsub.f32 %v617, %v643
    %v652 = vmul.f32 %v644, 1.442695
    %v653 = vpow.pop %v652
    %v654 = vmul.f32 %v645, 1.442695
    %v655 = vpow.pop %v654
    %v656 = vmul.f32 %v646, 1.442695
    %v657 = vpow.pop %v656
    %v658 = vmul.f32 %v647, 1.442695
    %v659 = vpow.pop %v658
    %v660 = vmul.f32 %v648, 1.442695
    %v661 = vpow.pop %v660
    %v662 = vmul.f32 %v649, 1.442695
    %v663 = vpow.pop %v662
    %v664 = vmul.f32 %v650, 1.442695
    %v665 = vpow.pop %v664
    %v666 = vmul.f32 %v651, 1.442695
    %v667 = vpow.pop %v666
    %v668 = vsel %vm619, %v653, 0.0
    %669 = vadd.xlane.f32.xlu0 %v668
    %v670 = vpop.xlane.xlu0 %669
    %v671 = vsel %vm619, %v655, 0.0
    %672 = vadd.xlane.f32.xlu0 %v671
    %v673 = vpop.xlane.xlu0 %672
    %v674 = vsel %vm619, %v657, 0.0
    %675 = vadd.xlane.f32.xlu0 %v674
    %v676 = vpop.xlane.xlu0 %675
    %v677 = vsel %vm619, %v659, 0.0
    %678 = vadd.xlane.f32.xlu0 %v677
    %v679 = vpop.xlane.xlu0 %678
    %v680 = vsel %vm619, %v661, 0.0
    %681 = vadd.xlane.f32.xlu0 %v680
    %v682 = vpop.xlane.xlu0 %681
    %v683 = vsel %vm619, %v663, 0.0
    %684 = vadd.xlane.f32.xlu0 %v683
    %v685 = vpop.xlane.xlu0 %684
    %v686 = vsel %vm619, %v665, 0.0
    %687 = vadd.xlane.f32.xlu0 %v686
    %v688 = vpop.xlane.xlu0 %687
    %v689 = vsel %vm619, %v667, 0.0
    %690 = vadd.xlane.f32.xlu0 %v689
    %v691 = vpop.xlane.xlu0 %690
    %v692 = vrcp.pop %v670
    %v693 = vmul.f32 %v670, %v692
    %v694 = vsub.f32 1.0, %v693
    %v695 = vmul.f32 %v692, %v694
    %v696 = vadd.f32 %v692, %v695
    %vm697 = vweird.f32 %v670
    %vm698 = vweird.f32 %v692
    %vm699 = vmor %vm697, %vm698
    %v700 = vsel %vm699, %v692, %v696
    %v701 = vand.u32 2147483647, %v670
    %vm702 = vcmp.eq.f32.partialorder %v701, 8.507059e+37
    %v703 = vand.u32 %v670, 2147483648
    %v704 = vor.u32 1.1754944e-38, %v703
    %v705 = vsel %vm702, %v704, %v700
    %v706 = vmul.f32 %v653, %v705
    %v707 = vrcp.pop %v673
    %v708 = vmul.f32 %v673, %v707
    %v709 = vsub.f32 1.0, %v708
    %v710 = vmul.f32 %v707, %v709
    %v711 = vadd.f32 %v707, %v710
    %vm712 = vweird.f32 %v673
    %vm713 = vweird.f32 %v707
    %vm714 = vmor %vm712, %vm713
    %v715 = vsel %vm714, %v707, %v711
    %v716 = vand.u32 2147483647, %v673
    %vm717 = vcmp.eq.f32.partialorder %v716, 8.507059e+37
    %v718 = vand.u32 %v673, 2147483648
    %v719 = vor.u32 1.1754944e-38, %v718
    %v720 = vsel %vm717, %v719, %v715
    %v721 = vmul.f32 %v655, %v720
    %v722 = vrcp.pop %v676
    %v723 = vmul.f32 %v676, %v722
    %v724 = vsub.f32 1.0, %v723
    %v725 = vmul.f32 %v722, %v724
    %v726 = vadd.f32 %v722, %v725
    %vm727 = vweird.f32 %v676
    %vm728 = vweird.f32 %v722
    %vm729 = vmor %vm727, %vm728
    %v730 = vsel %vm729, %v722, %v726
    %v731 = vand.u32 2147483647, %v676
    %vm732 = vcmp.eq.f32.partialorder %v731, 8.507059e+37
    %v733 = vand.u32 %v676, 2147483648
    %v734 = vor.u32 1.1754944e-38, %v733
    %v735 = vsel %vm732, %v734, %v730
    %v736 = vmul.f32 %v657, %v735
    %v737 = vrcp.pop %v679
    %v738 = vmul.f32 %v679, %v737
    %v739 = vsub.f32 1.0, %v738
    %v740 = vmul.f32 %v737, %v739
    %v741 = vadd.f32 %v737, %v740
    %vm742 = vweird.f32 %v679
    %vm743 = vweird.f32 %v737
    %vm744 = vmor %vm742, %vm743
    %v745 = vsel %vm744, %v737, %v741
    %v746 = vand.u32 2147483647, %v679
    %vm747 = vcmp.eq.f32.partialorder %v746, 8.507059e+37
    %v748 = vand.u32 %v679, 2147483648
    %v749 = vor.u32 1.1754944e-38, %v748
    %v750 = vsel %vm747, %v749, %v745
    %v751 = vmul.f32 %v659, %v750
    %v752 = vrcp.pop %v682
    %v753 = vmul.f32 %v682, %v752
    %v754 = vsub.f32 1.0, %v753
    %v755 = vmul.f32 %v752, %v754
    %v756 = vadd.f32 %v752, %v755
    %vm757 = vweird.f32 %v682
    %vm758 = vweird.f32 %v752
    %vm759 = vmor %vm757, %vm758
    %v760 = vsel %vm759, %v752, %v756
    %v761 = vand.u32 2147483647, %v682
    %vm762 = vcmp.eq.f32.partialorder %v761, 8.507059e+37
    %v763 = vand.u32 %v682, 2147483648
    %v764 = vor.u32 1.1754944e-38, %v763
    %v765 = vsel %vm762, %v764, %v760
    %v766 = vmul.f32 %v661, %v765
    %v767 = vrcp.pop %v685
    %v768 = vmul.f32 %v685, %v767
    %v769 = vsub.f32 1.0, %v768
    %v770 = vmul.f32 %v767, %v769
    %v771 = vadd.f32 %v767, %v770
    %vm772 = vweird.f32 %v685
    %vm773 = vweird.f32 %v767
    %vm774 = vmor %vm772, %vm773
    %v775 = vsel %vm774, %v767, %v771
    %v776 = vand.u32 2147483647, %v685
    %vm777 = vcmp.eq.f32.partialorder %v776, 8.507059e+37
    %v778 = vand.u32 %v685, 2147483648
    %v779 = vor.u32 1.1754944e-38, %v778
    %v780 = vsel %vm777, %v779, %v775
    %v781 = vmul.f32 %v663, %v780
    %v782 = vrcp.pop %v688
    %v783 = vmul.f32 %v688, %v782
    %v784 = vsub.f32 1.0, %v783
    %v785 = vmul.f32 %v782, %v784
    %v786 = vadd.f32 %v782, %v785
    %vm787 = vweird.f32 %v688
    %vm788 = vweird.f32 %v782
    %vm789 = vmor %vm787, %vm788
    %v790 = vsel %vm789, %v782, %v786
    %v791 = vand.u32 2147483647, %v688
    %vm792 = vcmp.eq.f32.partialorder %v791, 8.507059e+37
    %v793 = vand.u32 %v688, 2147483648
    %v794 = vor.u32 1.1754944e-38, %v793
    %v795 = vsel %vm792, %v794, %v790
    %v796 = vmul.f32 %v665, %v795
    %v797 = vrcp.pop %v691
    %v798 = vmul.f32 %v691, %v797
    %v799 = vsub.f32 1.0, %v798
    %v800 = vmul.f32 %v797, %v799
    %v801 = vadd.f32 %v797, %v800
    %vm802 = vweird.f32 %v691
    %vm803 = vweird.f32 %v797
    %vm804 = vmor %vm802, %vm803
    %v805 = vsel %vm804, %v797, %v801
    %v806 = vand.u32 2147483647, %v691
    %vm807 = vcmp.eq.f32.partialorder %v806, 8.507059e+37
    %v808 = vand.u32 %v691, 2147483648
    %v809 = vor.u32 1.1754944e-38, %v808
    %v810 = vsel %vm807, %v809, %v805
    %v811 = vmul.f32 %v667, %v810
    %vm812 = vcmask 64512
    %v814 = vsel %vm812, %v706, 0
    %816 = vmatpush.msra.mxu0 0.0
    %817 = vmatpush.msra.mxu0 0.0
    %818 = vmatpush.msra.mxu0 0.0
    %819 = vmatpush.msra.mxu0 0.0
    %820 = vmatpush.msra.mxu0 0.0
    %821 = vmatpush.msra.mxu0 0.0
    %822 = vmatpush.msra.mxu0 0.0
    %823 = vmatpush.msra.mxu0 0.0
    %824 = vmatpush.msra.mxu0 0.0
    %825 = vmatpush.msra.mxu0 0.0
    %826 = vmatpush.msra.mxu0 0.0
    %827 = vmatpush.msra.mxu0 0.0
    %828 = vmatpush.msra.mxu0 0.0
    %829 = vmatpush.msra.mxu0 0.0
    %830 = vmatpush.msra.mxu0 0.0
    %831 = vmatpush.msra.mxu0 %v400
    %832 = vmatmul.f32.gmra.mxu0 %v814
    %v833 = vpop.f32.mrf.mxu0
    %v834 = vadd.f32 0.0, %v833
    %835 = vdwg.mxu0
    %v837 = vsel %vm812, %v721, 0
    %839 = vmatpush.msra.mxu0 0.0
    %840 = vmatpush.msra.mxu0 0.0
    %841 = vmatpush.msra.mxu0 0.0
    %842 = vmatpush.msra.mxu0 0.0
    %843 = vmatpush.msra.mxu0 0.0
    %844 = vmatpush.msra.mxu0 0.0
    %845 = vmatpush.msra.mxu0 0.0
    %846 = vmatpush.msra.mxu0 0.0
    %847 = vmatpush.msra.mxu0 0.0
    %848 = vmatpush.msra.mxu0 0.0
    %849 = vmatpush.msra.mxu0 0.0
    %850 = vmatpush.msra.mxu0 0.0
    %851 = vmatpush.msra.mxu0 0.0
    %852 = vmatpush.msra.mxu0 0.0
    %853 = vmatpush.msra.mxu0 0.0
    %854 = vmatpush.msra.mxu0 %v401
    %855 = vmatmul.f32.gmra.mxu0 %v837
    %v856 = vpop.f32.mrf.mxu0
    %v857 = vadd.f32 0.0, %v856
    %858 = vdwg.mxu0
    %v860 = vsel %vm812, %v736, 0
    %862 = vmatpush.msra.mxu0 0.0
    %863 = vmatpush.msra.mxu0 0.0
    %864 = vmatpush.msra.mxu0 0.0
    %865 = vmatpush.msra.mxu0 0.0
    %866 = vmatpush.msra.mxu0 0.0
    %867 = vmatpush.msra.mxu0 0.0
    %868 = vmatpush.msra.mxu0 0.0
    %869 = vmatpush.msra.mxu0 0.0
    %870 = vmatpush.msra.mxu0 0.0
    %871 = vmatpush.msra.mxu0 0.0
    %872 = vmatpush.msra.mxu0 0.0
    %873 = vmatpush.msra.mxu0 0.0
    %874 = vmatpush.msra.mxu0 0.0
    %875 = vmatpush.msra.mxu0 0.0
    %876 = vmatpush.msra.mxu0 0.0
    %877 = vmatpush.msra.mxu0 %v402
    %878 = vmatmul.f32.gmra.mxu0 %v860
    %v879 = vpop.f32.mrf.mxu0
    %v880 = vadd.f32 0.0, %v879
    %881 = vdwg.mxu0
    %v883 = vsel %vm812, %v751, 0
    %885 = vmatpush.msra.mxu0 0.0
    %886 = vmatpush.msra.mxu0 0.0
    %887 = vmatpush.msra.mxu0 0.0
    %888 = vmatpush.msra.mxu0 0.0
    %889 = vmatpush.msra.mxu0 0.0
    %890 = vmatpush.msra.mxu0 0.0
    %891 = vmatpush.msra.mxu0 0.0
    %892 = vmatpush.msra.mxu0 0.0
    %893 = vmatpush.msra.mxu0 0.0
    %894 = vmatpush.msra.mxu0 0.0
    %895 = vmatpush.msra.mxu0 0.0
    %896 = vmatpush.msra.mxu0 0.0
    %897 = vmatpush.msra.mxu0 0.0
    %898 = vmatpush.msra.mxu0 0.0
    %899 = vmatpush.msra.mxu0 0.0
    %900 = vmatpush.msra.mxu0 %v403
    %901 = vmatmul.f32.gmra.mxu0 %v883
    %v902 = vpop.f32.mrf.mxu0
    %v903 = vadd.f32 0.0, %v902
    %904 = vdwg.mxu0
    %v906 = vsel %vm812, %v766, 0
    %908 = vmatpush.msra.mxu0 0.0
    %909 = vmatpush.msra.mxu0 0.0
    %910 = vmatpush.msra.mxu0 0.0
    %911 = vmatpush.msra.mxu0 0.0
    %912 = vmatpush.msra.mxu0 0.0
    %913 = vmatpush.msra.mxu0 0.0
    %914 = vmatpush.msra.mxu0 0.0
    %915 = vmatpush.msra.mxu0 0.0
    %916 = vmatpush.msra.mxu0 0.0
    %917 = vmatpush.msra.mxu0 0.0
    %918 = vmatpush.msra.mxu0 0.0
    %919 = vmatpush.msra.mxu0 0.0
    %920 = vmatpush.msra.mxu0 0.0
    %921 = vmatpush.msra.mxu0 0.0
    %922 = vmatpush.msra.mxu0 0.0
    %923 = vmatpush.msra.mxu0 %v404
    %924 = vmatmul.f32.gmra.mxu0 %v906
    %v925 = vpop.f32.mrf.mxu0
    %v926 = vadd.f32 0.0, %v925
    %927 = vdwg.mxu0
    %v929 = vsel %vm812, %v781, 0
    %931 = vmatpush.msra.mxu0 0.0
    %932 = vmatpush.msra.mxu0 0.0
    %933 = vmatpush.msra.mxu0 0.0
    %934 = vmatpush.msra.mxu0 0.0
    %935 = vmatpush.msra.mxu0 0.0
    %936 = vmatpush.msra.mxu0 0.0
    %937 = vmatpush.msra.mxu0 0.0
    %938 = vmatpush.msra.mxu0 0.0
    %939 = vmatpush.msra.mxu0 0.0
    %940 = vmatpush.msra.mxu0 0.0
    %941 = vmatpush.msra.mxu0 0.0
    %942 = vmatpush.msra.mxu0 0.0
    %943 = vmatpush.msra.mxu0 0.0
    %944 = vmatpush.msra.mxu0 0.0
    %945 = vmatpush.msra.mxu0 0.0
    %946 = vmatpush.msra.mxu0 %v405
    %947 = vmatmul.f32.gmra.mxu0 %v929
    %v948 = vpop.f32.mrf.mxu0
    %v949 = vadd.f32 0.0, %v948
    %950 = vdwg.mxu0
    %v952 = vsel %vm812, %v796, 0
    %954 = vmatpush.msra.mxu0 0.0
    %955 = vmatpush.msra.mxu0 0.0
    %956 = vmatpush.msra.mxu0 0.0
    %957 = vmatpush.msra.mxu0 0.0
    %958 = vmatpush.msra.mxu0 0.0
    %959 = vmatpush.msra.mxu0 0.0
    %960 = vmatpush.msra.mxu0 0.0
    %961 = vmatpush.msra.mxu0 0.0
    %962 = vmatpush.msra.mxu0 0.0
    %963 = vmatpush.msra.mxu0 0.0
    %964 = vmatpush.msra.mxu0 0.0
    %965 = vmatpush.msra.mxu0 0.0
    %966 = vmatpush.msra.mxu0 0.0
    %967 = vmatpush.msra.mxu0 0.0
    %968 = vmatpush.msra.mxu0 0.0
    %969 = vmatpush.msra.mxu0 %v406
    %970 = vmatmul.f32.gmra.mxu0 %v952
    %v971 = vpop.f32.mrf.mxu0
    %v972 = vadd.f32 0.0, %v971
    %973 = vdwg.mxu0
    %v975 = vsel %vm812, %v811, 0
    %977 = vmatpush.msra.mxu0 0.0
    %978 = vmatpush.msra.mxu0 0.0
    %979 = vmatpush.msra.mxu0 0.0
    %980 = vmatpush.msra.mxu0 0.0
    %981 = vmatpush.msra.mxu0 0.0
    %982 = vmatpush.msra.mxu0 0.0
    %983 = vmatpush.msra.mxu0 0.0
    %984 = vmatpush.msra.mxu0 0.0
    %985 = vmatpush.msra.mxu0 0.0
    %986 = vmatpush.msra.mxu0 0.0
    %987 = vmatpush.msra.mxu0 0.0
    %988 = vmatpush.msra.mxu0 0.0
    %989 = vmatpush.msra.mxu0 0.0
    %990 = vmatpush.msra.mxu0 0.0
    %991 = vmatpush.msra.mxu0 0.0
    %992 = vmatpush.msra.mxu0 %v407
    %993 = vmatmul.f32.gmra.mxu0 %v975
    %v994 = vpop.f32.mrf.mxu0
    %v995 = vadd.f32 0.0, %v994
    %996 = vdwg.mxu0
    %v997 = vld [vmem:[#allocation7] sm:$0xff]
    %v998 = vld [vmem:[#allocation7 + $0x8] sm:$0xff]
    %v999 = vld [vmem:[#allocation7 + $0x10] sm:$0xff]
    %v1000 = vld [vmem:[#allocation7 + $0x18] sm:$0xff]
    %v1001 = vld [vmem:[#allocation7 + $0x20] sm:$0xff]
    %v1002 = vld [vmem:[#allocation7 + $0x28] sm:$0xff]
    %v1003 = vld [vmem:[#allocation7 + $0x30] sm:$0xff]
    %v1004 = vld [vmem:[#allocation7 + $0x38] sm:$0xff]
    %v1005 = vld [vmem:[#allocation7 + $0x40] sm:$0xff]
    %v1006 = vld [vmem:[#allocation7 + $0x48] sm:$0xff]
    %v1007 = vld [vmem:[#allocation7 + $0x50] sm:$0xff]
    %v1008 = vld [vmem:[#allocation7 + $0x58] sm:$0xff]
    %v1009 = vld [vmem:[#allocation7 + $0x60] sm:$0xff]
    %v1010 = vld [vmem:[#allocation7 + $0x68] sm:$0xff]
    %v1011 = vld [vmem:[#allocation7 + $0x70] sm:$0xff]
    %v1012 = vld [vmem:[#allocation7 + $0x78] sm:$0xff]
    %v1013 = vld [vmem:[#allocation9] sm:$0xff]
    %v1014 = vld [vmem:[#allocation9 + $0x8] sm:$0xff]
    %v1015 = vld [vmem:[#allocation9 + $0x10] sm:$0xff]
    %v1016 = vld [vmem:[#allocation9 + $0x18] sm:$0xff]
    %v1017 = vld [vmem:[#allocation9 + $0x20] sm:$0xff]
    %v1018 = vld [vmem:[#allocation9 + $0x28] sm:$0xff]
    %v1019 = vld [vmem:[#allocation9 + $0x30] sm:$0xff]
    %v1020 = vld [vmem:[#allocation9 + $0x38] sm:$0xff]
    %v1021 = vld [vmem:[#allocation9 + $0x40] sm:$0xff]
    %v1022 = vld [vmem:[#allocation9 + $0x48] sm:$0xff]
    %v1023 = vld [vmem:[#allocation9 + $0x50] sm:$0xff]
    %v1024 = vld [vmem:[#allocation9 + $0x58] sm:$0xff]
    %v1025 = vld [vmem:[#allocation9 + $0x60] sm:$0xff]
    %v1026 = vld [vmem:[#allocation9 + $0x68] sm:$0xff]
    %v1027 = vld [vmem:[#allocation9 + $0x70] sm:$0xff]
    %v1028 = vld [vmem:[#allocation9 + $0x78] sm:$0xff]
    %1029 = vmatpush.msra.mxu0 %v1028
    %1030 = vmatpush.msra.mxu0 %v1027
    %1031 = vmatpush.msra.mxu0 %v1026
    %1032 = vmatpush.msra.mxu0 %v1025
    %1033 = vmatpush.msra.mxu0 %v1024
    %1034 = vmatpush.msra.mxu0 %v1023
    %1035 = vmatpush.msra.mxu0 %v1022
    %1036 = vmatpush.msra.mxu0 %v1021
    %1037 = vmatpush.msra.mxu0 %v1020
    %1038 = vmatpush.msra.mxu0 %v1019
    %1039 = vmatpush.msra.mxu0 %v1018
    %1040 = vmatpush.msra.mxu0 %v1017
    %1041 = vmatpush.msra.mxu0 %v1016
    %1042 = vmatpush.msra.mxu0 %v1015
    %1043 = vmatpush.msra.mxu0 %v1014
    %1044 = vmatpush.msra.mxu0 %v1013
    %1045 = vmatmul.f32.gmra.mxu0 %v398
    %v1046 = vpop.f32.mrf.mxu0
    %v1047 = vadd.f32 0.0, %v1046
    %1048 = vdwg.mxu0
    %v1057 = vrot.slane %v857, 7
    %vm1058 = vcmask 1041409
    %v1059 = vsel %vm1058, %v1057, %v834
    %v1060 = vrot.slane %v880, 6
    %vm1061 = vcmask 1042434
    %v1062 = vsel %vm1061, %v1060, %v1059
    %v1063 = vrot.slane %v903, 5
    %vm1064 = vcmask 1043459
    %v1065 = vsel %vm1064, %v1063, %v1062
    %v1066 = vrot.slane %v926, 4
    %vm1067 = vcmask 1044484
    %v1068 = vsel %vm1067, %v1066, %v1065
    %v1069 = vrot.slane %v949, 3
    %vm1070 = vcmask 1045509
    %v1071 = vsel %vm1070, %v1069, %v1068
    %v1072 = vrot.slane %v972, 2
    %vm1073 = vcmask 1046534
    %v1074 = vsel %vm1073, %v1072, %v1071
    %v1075 = vrot.slane %v995, 1
    %vm1076 = vcmask 1047559
    %v1077 = vsel %vm1076, %v1075, %v1074
    %1079 = vmatpush.msra.mxu0 %v1012
    %1080 = vmatpush.msra.mxu0 %v1011
    %1081 = vmatpush.msra.mxu0 %v1010
    %1082 = vmatpush.msra.mxu0 %v1009
    %1083 = vmatpush.msra.mxu0 %v1008
    %1084 = vmatpush.msra.mxu0 %v1007
    %1085 = vmatpush.msra.mxu0 %v1006
    %1086 = vmatpush.msra.mxu0 %v1005
    %1087 = vmatpush.msra.mxu0 %v1004
    %1088 = vmatpush.msra.mxu0 %v1003
    %1089 = vmatpush.msra.mxu0 %v1002
    %1090 = vmatpush.msra.mxu0 %v1001
    %1091 = vmatpush.msra.mxu0 %v1000
    %1092 = vmatpush.msra.mxu0 %v999
    %1093 = vmatpush.msra.mxu0 %v998
    %1094 = vmatpush.msra.mxu0 %v997
    %1095 = vmatmul.f32.gmra.mxu0 %v1077
    %v1096 = vpop.f32.mrf.mxu0
    %v1097 = vadd.f32 %v1047, %v1096
    %1098 = vdwg.mxu0
    %v1099 = vld [vmem:[%s10] sm:$0x1]
    %v1101 = vperm.slane %v1099, 0
    %v1103 = vadd.f32 %v1097, %v1101
    %v1104 = vtanh.pop %v1103
    %v1105 = vpack.c.bf16 %v1104, %v1104
    %1106 = vst [vmem:[%s12] sm:$0xf] %v1105
    // Predicated region
    $region66: #{decoder_gru_attn_step.2} parent=1 // pred_check
      _
    $region67: #{decoder_gru_attn_step.2} parent=1 // pred_check_branch
      %1108 = sbr.rel (0) target = $region69
    $region68: #{decoder_gru_attn_step.2} parent=1 // pred_region
      _
    $region69: #{decoder_gru_attn_step.2} parent=1 // pred_fallthru
      _
    // Predicated region
    $region70: #{decoder_gru_attn_step.2} parent=1 // pred_check
      _
    $region71: #{decoder_gru_attn_step.2} parent=1 // pred_check_branch
      %1110 = sbr.rel (0) target = $region73
    $region72: #{decoder_gru_attn_step.2} parent=1 // pred_region
      _
    $region73: #{decoder_gru_attn_step.2} parent=1 // pred_fallthru
      _
    // Predicated region
    $region74: #{decoder_gru_attn_step.2} parent=1 // pred_check
      _
    $region75: #{decoder_gru_attn_step.2} parent=1 // pred_check_branch
      %1112 = sbr.rel (0) target = $region77
    $region76: #{decoder_gru_attn_step.2} parent=1 // pred_region
      _
    $region77: #{decoder_gru_attn_step.2} parent=1 // pred_fallthru
      _
    // Predicated region
    $region78: #{decoder_gru_attn_step.2} parent=1 // pred_check
      _
    $region79: #{decoder_gru_attn_step.2} parent=1 // pred_check_branch
      %1114 = sbr.rel (0) target = $region81
    $region80: #{decoder_gru_attn_step.2} parent=1 // pred_region
      _
    $region81: #{decoder_gru_attn_step.2} parent=1 // pred_fallthru
      _
    %1115 = vsyncpa [#allocation3], 1
    %1116 = vsyncpa [#allocation5], 1
    %1117 = vsyncpa [#allocation8], 1

</llo_original>
